<compile_context>
chip_gen: v6e
topology: v6e:2x2x1
jax: 0.10.0
libtpu: 0.0.40
codegen_flags: <defaults>
</compile_context>

<pallas_src>
import jax
import jax.numpy as jnp
import numpy as np
from jax.experimental import pallas as pl
from jax.experimental.pallas import tpu as pltpu

ALPHA = 0.9      # snn.Synaptic alpha
BETA = 0.8       # snn.Synaptic beta
THRESH = 1.0     # snn.Synaptic default threshold, reset_mechanism="subtract"

# Small shapes consistent with the module (scaled-down spatial size).
T, B, CIN, H, W = 3, 2, 2, 16, 16
C1, C2 = 8, 16
K = 5
HO1 = H - K + 1          # 12  (conv1 output)
HP1 = HO1 // 2           # 6   (after 2x2 max-pool)
HO2 = HP1 - K + 1        # 2   (conv2 output)
HP2 = HO2 // 2           # 1   (after 2x2 max-pool)
N1 = B * HP1 * HP1       # 72  rows of layer-1 maps (b, oi, oj)
KCOLS = CIN * K * K      # 50  conv1 im2col columns (ci, kh, kw)
NP2 = B * HO2 * HO2      # 8   conv2 output rows (pool-slot-major, batch minor)
NTAP = K * K             # 25  conv2 kernel taps
NOUT = 3                 # fc1 out_features
NPOOL_ROWS = T * N1      # 216 pooled conv1 rows across all timesteps
NPATCH = 4 * NPOOL_ROWS  # 864 fused conv1 im2col rows (pool-slot major)

# ---- packed f32 constant-buffer layout (all row offsets 8-aligned) ----
R_W1 = 0                  # (KCOLS, C1)     conv1 weight, rows (ci, kh, kw)
R_B1 = 56                 # (1, C1)         conv1 bias
R_W2 = 64                 # (NTAP*C1, C2)   conv2 weight, rows (tap, ci)
R_B2 = 264                # (1, C2)         conv2 bias
R_WFC = 272               # (C2, NOUT)      fc weight (transposed), lane-padded
R_BFC = 288               # (1, NOUT)       fc bias, lane-padded
CROWS = 296
CCOLS = 128


def build_gather_matrix():
    """One-hot (NTAP*NP2, N1): row tap*NP2 + p selects spk1 row r(p, tap).

    p = (oi*HO2 + oj)*B + b (pool-slot-major), so the 2x2 max-pool after
    conv2 is a max over 4 contiguous B-row slabs.  Exact in bf16 ({0,1})."""
    g = np.zeros((NTAP * NP2, N1), np.float32)
    for kh in range(K):
        for kw in range(K):
            tap = kh * K + kw
            for oi in range(HO2):
                for oj in range(HO2):
                    for b in range(B):
                        p = (oi * HO2 + oj) * B + b
                        r = b * (HP1 * HP1) + (oi + kh) * HP1 + (oj + kw)
                        g[tap * NP2 + p, r] = 1.0
    return g


G_NP = build_gather_matrix()


def scnn_kernel(p_ref, g_ref, c_ref, out_ref, pooled_ref):
    # ---- conv1 for ALL timesteps / pool slots as ONE MXU matmul (hoisted) ----
    c1 = jnp.dot(p_ref[...], c_ref[R_W1:R_W1 + KCOLS, 0:C1],
                 preferred_element_type=jnp.float32)                   # (864, 8)
    # 2x2 max-pool: 4 contiguous, sublane-aligned 216-row slabs (slot-major rows).
    pooled = jnp.maximum(
        jnp.maximum(c1[0:NPOOL_ROWS], c1[NPOOL_ROWS:2 * NPOOL_ROWS]),
        jnp.maximum(c1[2 * NPOOL_ROWS:3 * NPOOL_ROWS],
                    c1[3 * NPOOL_ROWS:4 * NPOOL_ROWS]))                # (216, 8)
    # conv1 bias commutes with max-pool: add once, post-pool.
    pooled_ref[...] = pooled + c_ref[R_B1:R_B1 + 1, 0:C1]

    # LIF state, vreg-resident across the unrolled time loop.
    syn1 = jnp.zeros((N1, C1), jnp.float32)
    mem1 = jnp.zeros((N1, C1), jnp.float32)
    syn2 = jnp.zeros((B, C2), jnp.float32)
    mem2 = jnp.zeros((B, C2), jnp.float32)

    for t in range(T):  # static unroll of the strictly sequential recurrence
        cur1 = pooled_ref[t * N1:(t + 1) * N1, :]                      # (72, 8)

        # ---- LIF1 (reset-by-subtraction, Heaviside fire) ----
        reset1 = (mem1 > THRESH).astype(jnp.float32)
        syn1 = ALPHA * syn1 + cur1
        mem1 = BETA * mem1 + syn1 - reset1 * THRESH
        spk1_f32 = (mem1 > THRESH).astype(jnp.float32)                 # (72, 8)
        spk1 = spk1_f32.astype(jnp.bfloat16)                           # exact {0,1}

        # ---- conv2: bf16 MXU one-hot gather + ONE (8,200)@(200,16) matmul ----
        gathered = jnp.dot(g_ref[...], spk1,
                           preferred_element_type=jnp.float32)         # (200, 8)
        # Rearrange rows (tap, p) x cols (ci) into im2col M[p, tap*C1 + ci]
        # with 25 sublane-aligned slices + one lane-concatenation.
        m = jnp.concatenate(
            [gathered[tap * NP2:(tap + 1) * NP2, :] for tap in range(NTAP)],
            axis=1)                                                    # (8, 200)
        c2 = (jnp.dot(m, c_ref[R_W2:R_W2 + NTAP * C1, 0:C2],
                      preferred_element_type=jnp.float32)
              + c_ref[R_B2:R_B2 + 1, 0:C2])                            # (8, 16)

        # ---- 2x2 max-pool: 4 contiguous B-row slabs (pool-slot-major) ----
        pooled2 = jnp.maximum(jnp.maximum(c2[0:B], c2[B:2 * B]),
                              jnp.maximum(c2[2 * B:3 * B], c2[3 * B:4 * B]))

        # ---- LIF2 ----
        reset2 = (mem2 > THRESH).astype(jnp.float32)
        syn2 = ALPHA * syn2 + pooled2
        mem2 = BETA * mem2 + syn2 - reset2 * THRESH

    # Only the last timestep's fc output is observable: fire + fc1 once.
    spk2 = (mem2 > THRESH).astype(jnp.float32)                         # (B, 16)
    out_ref[...] = (jnp.dot(spk2, c_ref[R_WFC:R_WFC + C2, :],
                            preferred_element_type=jnp.float32)
                    + c_ref[R_BFC:R_BFC + 1, :])                       # (B, 128)


def im2col_conv1(x):
    """x: (T,B,CIN,H,W) -> (4*T*B*HP1*HP1, CIN*K*K) conv1 patches.

    Built from 25 static slices + stack/transpose/reshape (no XLA gather).
    Rows ordered (pool_slot, t, b, oi, oj); cols ordered (ci, kh, kw)."""
    taps = [x[:, :, :, kh:kh + HO1, kw:kw + HO1]
            for kh in range(K) for kw in range(K)]        # each (T,B,CIN,12,12)
    p = jnp.stack(taps, axis=-1)                          # (T,B,CIN,12,12,25)
    p = p.reshape(T, B, CIN, HP1, 2, HP1, 2, NTAP)        # split (oi,a),(oj,c)
    p = jnp.transpose(p, (4, 6, 0, 1, 3, 5, 2, 7))        # (a,c,T,B,oi,oj,CIN,tap)
    return p.reshape(NPATCH, KCOLS)


def pack_constants(w1, b1, w2, b2, wfc, bfc):
    """Pack all weights/biases into one (296, 128) f32 buffer (1 input DMA)."""
    w1f = jnp.transpose(w1, (1, 2, 3, 0)).reshape(KCOLS, C1)          # (50, 8)
    wcat = jnp.transpose(w2, (2, 3, 1, 0)).reshape(NTAP * C1, C2)     # (200, 16)
    c = jnp.zeros((CROWS, CCOLS), jnp.float32)
    c = c.at[R_W1:R_W1 + KCOLS, 0:C1].set(w1f)
    c = c.at[R_B1, 0:C1].set(b1)
    c = c.at[R_W2:R_W2 + NTAP * C1, 0:C2].set(wcat)
    c = c.at[R_B2, 0:C2].set(b2)
    c = c.at[R_WFC:R_WFC + C2, 0:NOUT].set(wfc.T)
    c = c.at[R_BFC, 0:NOUT].set(bfc)
    return c


@jax.jit
def scnn_forward(x, w1, b1, w2, b2, wfc, bfc):
    patches = im2col_conv1(x)                              # (864, 50) f32
    g = jnp.asarray(G_NP, dtype=jnp.bfloat16)              # (200, 72) one-hot
    consts = pack_constants(w1, b1, w2, b2, wfc, bfc)      # (296, 128) f32

    out = pl.pallas_call(
        scnn_kernel,
        out_shape=jax.ShapeDtypeStruct((B, CCOLS), jnp.float32),
        scratch_shapes=[pltpu.VMEM((NPOOL_ROWS, C1), jnp.float32)],
        cost_estimate=pl.CostEstimate(flops=1_600_000, transcendentals=0,
                                      bytes_accessed=360_000),
    )(patches, g, consts)
    return out[:, :NOUT]                                   # (B, 3)


def build_params(key):
    ks = jax.random.split(key, 6)
    w1 = jax.random.normal(ks[0], (C1, CIN, K, K), jnp.float32) * 0.2
    b1 = jax.random.normal(ks[1], (C1,), jnp.float32) * 0.1
    w2 = jax.random.normal(ks[2], (C2, C1, K, K), jnp.float32) * 0.2
    b2 = jax.random.normal(ks[3], (C2,), jnp.float32) * 0.1
    wfc = jax.random.normal(ks[4], (NOUT, C2 * HP2 * HP2), jnp.float32) * 0.2
    bfc = jax.random.normal(ks[5], (NOUT,), jnp.float32) * 0.1
    return w1, b1, w2, b2, wfc, bfc


def reference_forward(x, w1, b1, w2, b2, wfc, bfc):
    """Pure-JAX reference following the PyTorch/snntorch forward exactly."""
    hp = jax.lax.Precision.HIGHEST

    def conv(v, wgt, bias):
        out = jax.lax.conv_general_dilated(
            v, wgt, window_strides=(1, 1), padding="VALID",
            dimension_numbers=("NCHW", "OIHW", "NCHW"), precision=hp)
        return out + bias[None, :, None, None]

    def pool(v):
        return jax.lax.reduce_window(v, -jnp.inf, jax.lax.max,
                                     (1, 1, 2, 2), (1, 1, 2, 2), "VALID")

    syn1 = jnp.zeros((B, C1, HP1, HP1), jnp.float32); mem1 = jnp.zeros_like(syn1)
    syn2 = jnp.zeros((B, C2, HP2, HP2), jnp.float32); mem2 = jnp.zeros_like(syn2)
    vel = None
    for t in range(T):
        cur1 = pool(conv(x[t], w1, b1))
        r1 = (mem1 > THRESH).astype(jnp.float32)
        syn1 = ALPHA * syn1 + cur1
        mem1 = BETA * mem1 + syn1 - r1 * THRESH
        spk1 = (mem1 > THRESH).astype(jnp.float32)

        cur2 = pool(conv(spk1, w2, b2))
        r2 = (mem2 > THRESH).astype(jnp.float32)
        syn2 = ALPHA * syn2 + cur2
        mem2 = BETA * mem2 + syn2 - r2 * THRESH
        spk2 = (mem2 > THRESH).astype(jnp.float32)

        flat = spk2.reshape(B, -1)
        vel = jnp.dot(flat, wfc.T, precision=hp) + bfc
    return vel


if __name__ == "__main__":
    key = jax.random.PRNGKey(0)
    kx, kp = jax.random.split(key)
    x = jax.random.normal(kx, (T, B, CIN, H, W), jnp.float32)
    params = build_params(kp)

    out = scnn_forward(x, *params)
    out = jax.block_until_ready(out)
    assert out.shape == (B, NOUT)

    ref = reference_forward(x, *params)
    np.testing.assert_allclose(np.asarray(out), np.asarray(ref),
                               atol=5e-3, rtol=1e-3)
    print("KERNEL_OK")
</pallas_src>

<mosaic_0001>
module attributes {stable_mosaic.version = 11 : i64} {
  func.func @scnn_kernel(%arg0: memref<864x50xf32, #tpu.memory_space<vmem>>, %arg1: memref<200x72xbf16, #tpu.memory_space<vmem>>, %arg2: memref<296x128xf32, #tpu.memory_space<vmem>>, %arg3: memref<2x128xf32, #tpu.memory_space<vmem>>, %arg4: memref<216x8xf32, #tpu.memory_space<vmem>>) attributes {dimension_semantics = [], scalar_prefetch = 0 : i64, scratch_operands = 1 : i64, tpu.core_type = #tpu.core_type<tc>} {
    %c0 = arith.constant 0 : index
    %c0_0 = arith.constant 0 : index
    %0 = vector.load %arg0[%c0, %c0_0] : memref<864x50xf32, #tpu.memory_space<vmem>>, vector<864x50xf32>
    %c0_1 = arith.constant 0 : index
    %c0_2 = arith.constant 0 : index
    %1 = vector.load %arg2[%c0_1, %c0_2] : memref<296x128xf32, #tpu.memory_space<vmem>>, vector<50x8xf32>
    %cst = arith.constant dense<0.000000e+00> : vector<864x8xf32>
    %2 = tpu.matmul %0, %1, %cst {dimension_numbers = #tpu.dot_dimension_numbers<[1], [0], [0], [1], [0, 0, 1, 1], [], []>} : vector<864x50xf32>, vector<50x8xf32>, vector<864x8xf32> -> vector<864x8xf32>
    %3 = vector.extract_strided_slice %2 {offsets = [0, 0], sizes = [216, 8], strides = [1, 1]} : vector<864x8xf32> to vector<216x8xf32>
    %4 = vector.extract_strided_slice %2 {offsets = [216, 0], sizes = [216, 8], strides = [1, 1]} : vector<864x8xf32> to vector<216x8xf32>
    %5 = arith.maximumf %3, %4 : vector<216x8xf32>
    %6 = vector.extract_strided_slice %2 {offsets = [432, 0], sizes = [216, 8], strides = [1, 1]} : vector<864x8xf32> to vector<216x8xf32>
    %7 = vector.extract_strided_slice %2 {offsets = [648, 0], sizes = [216, 8], strides = [1, 1]} : vector<864x8xf32> to vector<216x8xf32>
    %8 = arith.maximumf %6, %7 : vector<216x8xf32>
    %9 = arith.maximumf %5, %8 : vector<216x8xf32>
    %c56 = arith.constant 56 : index
    %c0_3 = arith.constant 0 : index
    %10 = vector.load %arg2[%c56, %c0_3] : memref<296x128xf32, #tpu.memory_space<vmem>>, vector<1x8xf32>
    %11 = vector.broadcast %10 : vector<1x8xf32> to vector<216x8xf32>
    %12 = arith.addf %9, %11 : vector<216x8xf32>
    %c0_4 = arith.constant 0 : index
    %c0_5 = arith.constant 0 : index
    %13 = vector.load %arg4[%c0_4, %c0_5] : memref<216x8xf32, #tpu.memory_space<vmem>>, vector<216x8xf32>
    tpu.vector_store %arg4[%c0_4, %c0_5], %12 {strides = array<i32>} : memref<216x8xf32, #tpu.memory_space<vmem>>, vector<216x8xf32>,
    %cst_6 = arith.constant 0.000000e+00 : f32
    %14 = vector.broadcast %cst_6 : f32 to vector<72x8xf32>
    %cst_7 = arith.constant 0.000000e+00 : f32
    %15 = vector.broadcast %cst_7 : f32 to vector<72x8xf32>
    %cst_8 = arith.constant 0.000000e+00 : f32
    %16 = vector.broadcast %cst_8 : f32 to vector<2x16xf32>
    %cst_9 = arith.constant 0.000000e+00 : f32
    %17 = vector.broadcast %cst_9 : f32 to vector<2x16xf32>
    %c0_10 = arith.constant 0 : index
    %c0_11 = arith.constant 0 : index
    %18 = vector.load %arg4[%c0_10, %c0_11] : memref<216x8xf32, #tpu.memory_space<vmem>>, vector<72x8xf32>
    %cst_12 = arith.constant 1.000000e+00 : f32
    %19 = vector.broadcast %cst_12 : f32 to vector<72x8xf32>
    %20 = arith.cmpf ogt, %15, %19 : vector<72x8xf32>
    %21 = arith.extui %20 : vector<72x8xi1> to vector<72x8xi32>
    %22 = arith.sitofp %21 : vector<72x8xi32> to vector<72x8xf32>
    %cst_13 = arith.constant 0.899999976 : f32
    %23 = vector.broadcast %cst_13 : f32 to vector<72x8xf32>
    %24 = arith.mulf %23, %14 : vector<72x8xf32>
    %25 = arith.addf %24, %18 : vector<72x8xf32>
    %cst_14 = arith.constant 8.000000e-01 : f32
    %26 = vector.broadcast %cst_14 : f32 to vector<72x8xf32>
    %27 = arith.mulf %26, %15 : vector<72x8xf32>
    %28 = arith.addf %27, %25 : vector<72x8xf32>
    %cst_15 = arith.constant 1.000000e+00 : f32
    %29 = vector.broadcast %cst_15 : f32 to vector<72x8xf32>
    %30 = arith.mulf %22, %29 : vector<72x8xf32>
    %31 = arith.subf %28, %30 : vector<72x8xf32>
    %cst_16 = arith.constant 1.000000e+00 : f32
    %32 = vector.broadcast %cst_16 : f32 to vector<72x8xf32>
    %33 = arith.cmpf ogt, %31, %32 : vector<72x8xf32>
    %34 = arith.extui %33 : vector<72x8xi1> to vector<72x8xi32>
    %35 = arith.sitofp %34 : vector<72x8xi32> to vector<72x8xf32>
    %36 = arith.truncf %35 : vector<72x8xf32> to vector<72x8xbf16>
    %c0_17 = arith.constant 0 : index
    %c0_18 = arith.constant 0 : index
    %37 = vector.load %arg1[%c0_17, %c0_18] : memref<200x72xbf16, #tpu.memory_space<vmem>>, vector<200x72xbf16>
    %cst_19 = arith.constant dense<0.000000e+00> : vector<200x8xf32>
    %38 = tpu.matmul %37, %36, %cst_19 {dimension_numbers = #tpu.dot_dimension_numbers<[1], [0], [0], [1], [0, 0, 1, 1], [], []>} : vector<200x72xbf16>, vector<72x8xbf16>, vector<200x8xf32> -> vector<200x8xf32>
    %39 = vector.extract_strided_slice %38 {offsets = [0, 0], sizes = [8, 8], strides = [1, 1]} : vector<200x8xf32> to vector<8x8xf32>
    %40 = vector.extract_strided_slice %38 {offsets = [8, 0], sizes = [8, 8], strides = [1, 1]} : vector<200x8xf32> to vector<8x8xf32>
    %41 = vector.extract_strided_slice %38 {offsets = [16, 0], sizes = [8, 8], strides = [1, 1]} : vector<200x8xf32> to vector<8x8xf32>
    %42 = vector.extract_strided_slice %38 {offsets = [24, 0], sizes = [8, 8], strides = [1, 1]} : vector<200x8xf32> to vector<8x8xf32>
    %43 = vector.extract_strided_slice %38 {offsets = [32, 0], sizes = [8, 8], strides = [1, 1]} : vector<200x8xf32> to vector<8x8xf32>
    %44 = vector.extract_strided_slice %38 {offsets = [40, 0], sizes = [8, 8], strides = [1, 1]} : vector<200x8xf32> to vector<8x8xf32>
    %45 = vector.extract_strided_slice %38 {offsets = [48, 0], sizes = [8, 8], strides = [1, 1]} : vector<200x8xf32> to vector<8x8xf32>
    %46 = vector.extract_strided_slice %38 {offsets = [56, 0], sizes = [8, 8], strides = [1, 1]} : vector<200x8xf32> to vector<8x8xf32>
    %47 = vector.extract_strided_slice %38 {offsets = [64, 0], sizes = [8, 8], strides = [1, 1]} : vector<200x8xf32> to vector<8x8xf32>
    %48 = vector.extract_strided_slice %38 {offsets = [72, 0], sizes = [8, 8], strides = [1, 1]} : vector<200x8xf32> to vector<8x8xf32>
    %49 = vector.extract_strided_slice %38 {offsets = [80, 0], sizes = [8, 8], strides = [1, 1]} : vector<200x8xf32> to vector<8x8xf32>
    %50 = vector.extract_strided_slice %38 {offsets = [88, 0], sizes = [8, 8], strides = [1, 1]} : vector<200x8xf32> to vector<8x8xf32>
    %51 = vector.extract_strided_slice %38 {offsets = [96, 0], sizes = [8, 8], strides = [1, 1]} : vector<200x8xf32> to vector<8x8xf32>
    %52 = vector.extract_strided_slice %38 {offsets = [104, 0], sizes = [8, 8], strides = [1, 1]} : vector<200x8xf32> to vector<8x8xf32>
    %53 = vector.extract_strided_slice %38 {offsets = [112, 0], sizes = [8, 8], strides = [1, 1]} : vector<200x8xf32> to vector<8x8xf32>
    %54 = vector.extract_strided_slice %38 {offsets = [120, 0], sizes = [8, 8], strides = [1, 1]} : vector<200x8xf32> to vector<8x8xf32>
    %55 = vector.extract_strided_slice %38 {offsets = [128, 0], sizes = [8, 8], strides = [1, 1]} : vector<200x8xf32> to vector<8x8xf32>
    %56 = vector.extract_strided_slice %38 {offsets = [136, 0], sizes = [8, 8], strides = [1, 1]} : vector<200x8xf32> to vector<8x8xf32>
    %57 = vector.extract_strided_slice %38 {offsets = [144, 0], sizes = [8, 8], strides = [1, 1]} : vector<200x8xf32> to vector<8x8xf32>
    %58 = vector.extract_strided_slice %38 {offsets = [152, 0], sizes = [8, 8], strides = [1, 1]} : vector<200x8xf32> to vector<8x8xf32>
    %59 = vector.extract_strided_slice %38 {offsets = [160, 0], sizes = [8, 8], strides = [1, 1]} : vector<200x8xf32> to vector<8x8xf32>
    %60 = vector.extract_strided_slice %38 {offsets = [168, 0], sizes = [8, 8], strides = [1, 1]} : vector<200x8xf32> to vector<8x8xf32>
    %61 = vector.extract_strided_slice %38 {offsets = [176, 0], sizes = [8, 8], strides = [1, 1]} : vector<200x8xf32> to vector<8x8xf32>
    %62 = vector.extract_strided_slice %38 {offsets = [184, 0], sizes = [8, 8], strides = [1, 1]} : vector<200x8xf32> to vector<8x8xf32>
    %63 = vector.extract_strided_slice %38 {offsets = [192, 0], sizes = [8, 8], strides = [1, 1]} : vector<200x8xf32> to vector<8x8xf32>
    %64 = tpu.concatenate %39, %40, %41, %42, %43, %44, %45, %46, %47, %48, %49, %50, %51, %52, %53, %54 in 1 : vector<8x8xf32>, vector<8x8xf32>, vector<8x8xf32>, vector<8x8xf32>, vector<8x8xf32>, vector<8x8xf32>, vector<8x8xf32>, vector<8x8xf32>, vector<8x8xf32>, vector<8x8xf32>, vector<8x8xf32>, vector<8x8xf32>, vector<8x8xf32>, vector<8x8xf32>, vector<8x8xf32>, vector<8x8xf32> -> vector<8x128xf32>
    %65 = tpu.concatenate %55, %56, %57, %58, %59, %60, %61, %62, %63 in 1 : vector<8x8xf32>, vector<8x8xf32>, vector<8x8xf32>, vector<8x8xf32>, vector<8x8xf32>, vector<8x8xf32>, vector<8x8xf32>, vector<8x8xf32>, vector<8x8xf32> -> vector<8x72xf32>
    %66 = tpu.concatenate %64, %65 in 1 : vector<8x128xf32>, vector<8x72xf32> -> vector<8x200xf32>
    %c64 = arith.constant 64 : index
    %c0_20 = arith.constant 0 : index
    %67 = vector.load %arg2[%c64, %c0_20] : memref<296x128xf32, #tpu.memory_space<vmem>>, vector<200x16xf32>
    %cst_21 = arith.constant dense<0.000000e+00> : vector<8x16xf32>
    %68 = tpu.matmul %66, %67, %cst_21 {dimension_numbers = #tpu.dot_dimension_numbers<[1], [0], [0], [1], [0, 0, 1, 1], [], []>} : vector<8x200xf32>, vector<200x16xf32>, vector<8x16xf32> -> vector<8x16xf32>
    %c264 = arith.constant 264 : index
    %c0_22 = arith.constant 0 : index
    %69 = vector.load %arg2[%c264, %c0_22] : memref<296x128xf32, #tpu.memory_space<vmem>>, vector<1x16xf32>
    %70 = vector.broadcast %69 : vector<1x16xf32> to vector<8x16xf32>
    %71 = arith.addf %68, %70 : vector<8x16xf32>
    %72 = vector.extract_strided_slice %71 {offsets = [0, 0], sizes = [2, 16], strides = [1, 1]} : vector<8x16xf32> to vector<2x16xf32>
    %73 = vector.extract_strided_slice %71 {offsets = [2, 0], sizes = [2, 16], strides = [1, 1]} : vector<8x16xf32> to vector<2x16xf32>
    %74 = arith.maximumf %72, %73 : vector<2x16xf32>
    %75 = vector.extract_strided_slice %71 {offsets = [4, 0], sizes = [2, 16], strides = [1, 1]} : vector<8x16xf32> to vector<2x16xf32>
    %76 = vector.extract_strided_slice %71 {offsets = [6, 0], sizes = [2, 16], strides = [1, 1]} : vector<8x16xf32> to vector<2x16xf32>
    %77 = arith.maximumf %75, %76 : vector<2x16xf32>
    %78 = arith.maximumf %74, %77 : vector<2x16xf32>
    %cst_23 = arith.constant 1.000000e+00 : f32
    %79 = vector.broadcast %cst_23 : f32 to vector<2x16xf32>
    %80 = arith.cmpf ogt, %17, %79 : vector<2x16xf32>
    %81 = arith.extui %80 : vector<2x16xi1> to vector<2x16xi32>
    %82 = arith.sitofp %81 : vector<2x16xi32> to vector<2x16xf32>
    %cst_24 = arith.constant 0.899999976 : f32
    %83 = vector.broadcast %cst_24 : f32 to vector<2x16xf32>
    %84 = arith.mulf %83, %16 : vector<2x16xf32>
    %85 = arith.addf %84, %78 : vector<2x16xf32>
    %cst_25 = arith.constant 8.000000e-01 : f32
    %86 = vector.broadcast %cst_25 : f32 to vector<2x16xf32>
    %87 = arith.mulf %86, %17 : vector<2x16xf32>
    %88 = arith.addf %87, %85 : vector<2x16xf32>
    %cst_26 = arith.constant 1.000000e+00 : f32
    %89 = vector.broadcast %cst_26 : f32 to vector<2x16xf32>
    %90 = arith.mulf %82, %89 : vector<2x16xf32>
    %91 = arith.subf %88, %90 : vector<2x16xf32>
    %c72 = arith.constant 72 : index
    %c0_27 = arith.constant 0 : index
    %92 = vector.load %arg4[%c72, %c0_27] : memref<216x8xf32, #tpu.memory_space<vmem>>, vector<72x8xf32>
    %cst_28 = arith.constant 1.000000e+00 : f32
    %93 = vector.broadcast %cst_28 : f32 to vector<72x8xf32>
    %94 = arith.cmpf ogt, %31, %93 : vector<72x8xf32>
    %95 = arith.extui %94 : vector<72x8xi1> to vector<72x8xi32>
    %96 = arith.sitofp %95 : vector<72x8xi32> to vector<72x8xf32>
    %cst_29 = arith.constant 0.899999976 : f32
    %97 = vector.broadcast %cst_29 : f32 to vector<72x8xf32>
    %98 = arith.mulf %97, %25 : vector<72x8xf32>
    %99 = arith.addf %98, %92 : vector<72x8xf32>
    %cst_30 = arith.constant 8.000000e-01 : f32
    %100 = vector.broadcast %cst_30 : f32 to vector<72x8xf32>
    %101 = arith.mulf %100, %31 : vector<72x8xf32>
    %102 = arith.addf %101, %99 : vector<72x8xf32>
    %cst_31 = arith.constant 1.000000e+00 : f32
    %103 = vector.broadcast %cst_31 : f32 to vector<72x8xf32>
    %104 = arith.mulf %96, %103 : vector<72x8xf32>
    %105 = arith.subf %102, %104 : vector<72x8xf32>
    %cst_32 = arith.constant 1.000000e+00 : f32
    %106 = vector.broadcast %cst_32 : f32 to vector<72x8xf32>
    %107 = arith.cmpf ogt, %105, %106 : vector<72x8xf32>
    %108 = arith.extui %107 : vector<72x8xi1> to vector<72x8xi32>
    %109 = arith.sitofp %108 : vector<72x8xi32> to vector<72x8xf32>
    %110 = arith.truncf %109 : vector<72x8xf32> to vector<72x8xbf16>
    %c0_33 = arith.constant 0 : index
    %c0_34 = arith.constant 0 : index
    %111 = vector.load %arg1[%c0_33, %c0_34] : memref<200x72xbf16, #tpu.memory_space<vmem>>, vector<200x72xbf16>
    %cst_35 = arith.constant dense<0.000000e+00> : vector<200x8xf32>
    %112 = tpu.matmul %111, %110, %cst_35 {dimension_numbers = #tpu.dot_dimension_numbers<[1], [0], [0], [1], [0, 0, 1, 1], [], []>} : vector<200x72xbf16>, vector<72x8xbf16>, vector<200x8xf32> -> vector<200x8xf32>
    %113 = vector.extract_strided_slice %112 {offsets = [0, 0], sizes = [8, 8], strides = [1, 1]} : vector<200x8xf32> to vector<8x8xf32>
    %114 = vector.extract_strided_slice %112 {offsets = [8, 0], sizes = [8, 8], strides = [1, 1]} : vector<200x8xf32> to vector<8x8xf32>
    %115 = vector.extract_strided_slice %112 {offsets = [16, 0], sizes = [8, 8], strides = [1, 1]} : vector<200x8xf32> to vector<8x8xf32>
    %116 = vector.extract_strided_slice %112 {offsets = [24, 0], sizes = [8, 8], strides = [1, 1]} : vector<200x8xf32> to vector<8x8xf32>
    %117 = vector.extract_strided_slice %112 {offsets = [32, 0], sizes = [8, 8], strides = [1, 1]} : vector<200x8xf32> to vector<8x8xf32>
    %118 = vector.extract_strided_slice %112 {offsets = [40, 0], sizes = [8, 8], strides = [1, 1]} : vector<200x8xf32> to vector<8x8xf32>
    %119 = vector.extract_strided_slice %112 {offsets = [48, 0], sizes = [8, 8], strides = [1, 1]} : vector<200x8xf32> to vector<8x8xf32>
    %120 = vector.extract_strided_slice %112 {offsets = [56, 0], sizes = [8, 8], strides = [1, 1]} : vector<200x8xf32> to vector<8x8xf32>
    %121 = vector.extract_strided_slice %112 {offsets = [64, 0], sizes = [8, 8], strides = [1, 1]} : vector<200x8xf32> to vector<8x8xf32>
    %122 = vector.extract_strided_slice %112 {offsets = [72, 0], sizes = [8, 8], strides = [1, 1]} : vector<200x8xf32> to vector<8x8xf32>
    %123 = vector.extract_strided_slice %112 {offsets = [80, 0], sizes = [8, 8], strides = [1, 1]} : vector<200x8xf32> to vector<8x8xf32>
    %124 = vector.extract_strided_slice %112 {offsets = [88, 0], sizes = [8, 8], strides = [1, 1]} : vector<200x8xf32> to vector<8x8xf32>
    %125 = vector.extract_strided_slice %112 {offsets = [96, 0], sizes = [8, 8], strides = [1, 1]} : vector<200x8xf32> to vector<8x8xf32>
    %126 = vector.extract_strided_slice %112 {offsets = [104, 0], sizes = [8, 8], strides = [1, 1]} : vector<200x8xf32> to vector<8x8xf32>
    %127 = vector.extract_strided_slice %112 {offsets = [112, 0], sizes = [8, 8], strides = [1, 1]} : vector<200x8xf32> to vector<8x8xf32>
    %128 = vector.extract_strided_slice %112 {offsets = [120, 0], sizes = [8, 8], strides = [1, 1]} : vector<200x8xf32> to vector<8x8xf32>
    %129 = vector.extract_strided_slice %112 {offsets = [128, 0], sizes = [8, 8], strides = [1, 1]} : vector<200x8xf32> to vector<8x8xf32>
    %130 = vector.extract_strided_slice %112 {offsets = [136, 0], sizes = [8, 8], strides = [1, 1]} : vector<200x8xf32> to vector<8x8xf32>
    %131 = vector.extract_strided_slice %112 {offsets = [144, 0], sizes = [8, 8], strides = [1, 1]} : vector<200x8xf32> to vector<8x8xf32>
    %132 = vector.extract_strided_slice %112 {offsets = [152, 0], sizes = [8, 8], strides = [1, 1]} : vector<200x8xf32> to vector<8x8xf32>
    %133 = vector.extract_strided_slice %112 {offsets = [160, 0], sizes = [8, 8], strides = [1, 1]} : vector<200x8xf32> to vector<8x8xf32>
    %134 = vector.extract_strided_slice %112 {offsets = [168, 0], sizes = [8, 8], strides = [1, 1]} : vector<200x8xf32> to vector<8x8xf32>
    %135 = vector.extract_strided_slice %112 {offsets = [176, 0], sizes = [8, 8], strides = [1, 1]} : vector<200x8xf32> to vector<8x8xf32>
    %136 = vector.extract_strided_slice %112 {offsets = [184, 0], sizes = [8, 8], strides = [1, 1]} : vector<200x8xf32> to vector<8x8xf32>
    %137 = vector.extract_strided_slice %112 {offsets = [192, 0], sizes = [8, 8], strides = [1, 1]} : vector<200x8xf32> to vector<8x8xf32>
    %138 = tpu.concatenate %113, %114, %115, %116, %117, %118, %119, %120, %121, %122, %123, %124, %125, %126, %127, %128 in 1 : vector<8x8xf32>, vector<8x8xf32>, vector<8x8xf32>, vector<8x8xf32>, vector<8x8xf32>, vector<8x8xf32>, vector<8x8xf32>, vector<8x8xf32>, vector<8x8xf32>, vector<8x8xf32>, vector<8x8xf32>, vector<8x8xf32>, vector<8x8xf32>, vector<8x8xf32>, vector<8x8xf32>, vector<8x8xf32> -> vector<8x128xf32>
    %139 = tpu.concatenate %129, %130, %131, %132, %133, %134, %135, %136, %137 in 1 : vector<8x8xf32>, vector<8x8xf32>, vector<8x8xf32>, vector<8x8xf32>, vector<8x8xf32>, vector<8x8xf32>, vector<8x8xf32>, vector<8x8xf32>, vector<8x8xf32> -> vector<8x72xf32>
    %140 = tpu.concatenate %138, %139 in 1 : vector<8x128xf32>, vector<8x72xf32> -> vector<8x200xf32>
    %c64_36 = arith.constant 64 : index
    %c0_37 = arith.constant 0 : index
    %141 = vector.load %arg2[%c64_36, %c0_37] : memref<296x128xf32, #tpu.memory_space<vmem>>, vector<200x16xf32>
    %cst_38 = arith.constant dense<0.000000e+00> : vector<8x16xf32>
    %142 = tpu.matmul %140, %141, %cst_38 {dimension_numbers = #tpu.dot_dimension_numbers<[1], [0], [0], [1], [0, 0, 1, 1], [], []>} : vector<8x200xf32>, vector<200x16xf32>, vector<8x16xf32> -> vector<8x16xf32>
    %c264_39 = arith.constant 264 : index
    %c0_40 = arith.constant 0 : index
    %143 = vector.load %arg2[%c264_39, %c0_40] : memref<296x128xf32, #tpu.memory_space<vmem>>, vector<1x16xf32>
    %144 = vector.broadcast %143 : vector<1x16xf32> to vector<8x16xf32>
    %145 = arith.addf %142, %144 : vector<8x16xf32>
    %146 = vector.extract_strided_slice %145 {offsets = [0, 0], sizes = [2, 16], strides = [1, 1]} : vector<8x16xf32> to vector<2x16xf32>
    %147 = vector.extract_strided_slice %145 {offsets = [2, 0], sizes = [2, 16], strides = [1, 1]} : vector<8x16xf32> to vector<2x16xf32>
    %148 = arith.maximumf %146, %147 : vector<2x16xf32>
    %149 = vector.extract_strided_slice %145 {offsets = [4, 0], sizes = [2, 16], strides = [1, 1]} : vector<8x16xf32> to vector<2x16xf32>
    %150 = vector.extract_strided_slice %145 {offsets = [6, 0], sizes = [2, 16], strides = [1, 1]} : vector<8x16xf32> to vector<2x16xf32>
    %151 = arith.maximumf %149, %150 : vector<2x16xf32>
    %152 = arith.maximumf %148, %151 : vector<2x16xf32>
    %cst_41 = arith.constant 1.000000e+00 : f32
    %153 = vector.broadcast %cst_41 : f32 to vector<2x16xf32>
    %154 = arith.cmpf ogt, %91, %153 : vector<2x16xf32>
    %155 = arith.extui %154 : vector<2x16xi1> to vector<2x16xi32>
    %156 = arith.sitofp %155 : vector<2x16xi32> to vector<2x16xf32>
    %cst_42 = arith.constant 0.899999976 : f32
    %157 = vector.broadcast %cst_42 : f32 to vector<2x16xf32>
    %158 = arith.mulf %157, %85 : vector<2x16xf32>
    %159 = arith.addf %158, %152 : vector<2x16xf32>
    %cst_43 = arith.constant 8.000000e-01 : f32
    %160 = vector.broadcast %cst_43 : f32 to vector<2x16xf32>
    %161 = arith.mulf %160, %91 : vector<2x16xf32>
    %162 = arith.addf %161, %159 : vector<2x16xf32>
    %cst_44 = arith.constant 1.000000e+00 : f32
    %163 = vector.broadcast %cst_44 : f32 to vector<2x16xf32>
    %164 = arith.mulf %156, %163 : vector<2x16xf32>
    %165 = arith.subf %162, %164 : vector<2x16xf32>
    %c144 = arith.constant 144 : index
    %c0_45 = arith.constant 0 : index
    %166 = vector.load %arg4[%c144, %c0_45] : memref<216x8xf32, #tpu.memory_space<vmem>>, vector<72x8xf32>
    %cst_46 = arith.constant 1.000000e+00 : f32
    %167 = vector.broadcast %cst_46 : f32 to vector<72x8xf32>
    %168 = arith.cmpf ogt, %105, %167 : vector<72x8xf32>
    %169 = arith.extui %168 : vector<72x8xi1> to vector<72x8xi32>
    %170 = arith.sitofp %169 : vector<72x8xi32> to vector<72x8xf32>
    %cst_47 = arith.constant 0.899999976 : f32
    %171 = vector.broadcast %cst_47 : f32 to vector<72x8xf32>
    %172 = arith.mulf %171, %99 : vector<72x8xf32>
    %173 = arith.addf %172, %166 : vector<72x8xf32>
    %cst_48 = arith.constant 8.000000e-01 : f32
    %174 = vector.broadcast %cst_48 : f32 to vector<72x8xf32>
    %175 = arith.mulf %174, %105 : vector<72x8xf32>
    %176 = arith.addf %175, %173 : vector<72x8xf32>
    %cst_49 = arith.constant 1.000000e+00 : f32
    %177 = vector.broadcast %cst_49 : f32 to vector<72x8xf32>
    %178 = arith.mulf %170, %177 : vector<72x8xf32>
    %179 = arith.subf %176, %178 : vector<72x8xf32>
    %cst_50 = arith.constant 1.000000e+00 : f32
    %180 = vector.broadcast %cst_50 : f32 to vector<72x8xf32>
    %181 = arith.cmpf ogt, %179, %180 : vector<72x8xf32>
    %182 = arith.extui %181 : vector<72x8xi1> to vector<72x8xi32>
    %183 = arith.sitofp %182 : vector<72x8xi32> to vector<72x8xf32>
    %184 = arith.truncf %183 : vector<72x8xf32> to vector<72x8xbf16>
    %c0_51 = arith.constant 0 : index
    %c0_52 = arith.constant 0 : index
    %185 = vector.load %arg1[%c0_51, %c0_52] : memref<200x72xbf16, #tpu.memory_space<vmem>>, vector<200x72xbf16>
    %cst_53 = arith.constant dense<0.000000e+00> : vector<200x8xf32>
    %186 = tpu.matmul %185, %184, %cst_53 {dimension_numbers = #tpu.dot_dimension_numbers<[1], [0], [0], [1], [0, 0, 1, 1], [], []>} : vector<200x72xbf16>, vector<72x8xbf16>, vector<200x8xf32> -> vector<200x8xf32>
    %187 = vector.extract_strided_slice %186 {offsets = [0, 0], sizes = [8, 8], strides = [1, 1]} : vector<200x8xf32> to vector<8x8xf32>
    %188 = vector.extract_strided_slice %186 {offsets = [8, 0], sizes = [8, 8], strides = [1, 1]} : vector<200x8xf32> to vector<8x8xf32>
    %189 = vector.extract_strided_slice %186 {offsets = [16, 0], sizes = [8, 8], strides = [1, 1]} : vector<200x8xf32> to vector<8x8xf32>
    %190 = vector.extract_strided_slice %186 {offsets = [24, 0], sizes = [8, 8], strides = [1, 1]} : vector<200x8xf32> to vector<8x8xf32>
    %191 = vector.extract_strided_slice %186 {offsets = [32, 0], sizes = [8, 8], strides = [1, 1]} : vector<200x8xf32> to vector<8x8xf32>
    %192 = vector.extract_strided_slice %186 {offsets = [40, 0], sizes = [8, 8], strides = [1, 1]} : vector<200x8xf32> to vector<8x8xf32>
    %193 = vector.extract_strided_slice %186 {offsets = [48, 0], sizes = [8, 8], strides = [1, 1]} : vector<200x8xf32> to vector<8x8xf32>
    %194 = vector.extract_strided_slice %186 {offsets = [56, 0], sizes = [8, 8], strides = [1, 1]} : vector<200x8xf32> to vector<8x8xf32>
    %195 = vector.extract_strided_slice %186 {offsets = [64, 0], sizes = [8, 8], strides = [1, 1]} : vector<200x8xf32> to vector<8x8xf32>
    %196 = vector.extract_strided_slice %186 {offsets = [72, 0], sizes = [8, 8], strides = [1, 1]} : vector<200x8xf32> to vector<8x8xf32>
    %197 = vector.extract_strided_slice %186 {offsets = [80, 0], sizes = [8, 8], strides = [1, 1]} : vector<200x8xf32> to vector<8x8xf32>
    %198 = vector.extract_strided_slice %186 {offsets = [88, 0], sizes = [8, 8], strides = [1, 1]} : vector<200x8xf32> to vector<8x8xf32>
    %199 = vector.extract_strided_slice %186 {offsets = [96, 0], sizes = [8, 8], strides = [1, 1]} : vector<200x8xf32> to vector<8x8xf32>
    %200 = vector.extract_strided_slice %186 {offsets = [104, 0], sizes = [8, 8], strides = [1, 1]} : vector<200x8xf32> to vector<8x8xf32>
    %201 = vector.extract_strided_slice %186 {offsets = [112, 0], sizes = [8, 8], strides = [1, 1]} : vector<200x8xf32> to vector<8x8xf32>
    %202 = vector.extract_strided_slice %186 {offsets = [120, 0], sizes = [8, 8], strides = [1, 1]} : vector<200x8xf32> to vector<8x8xf32>
    %203 = vector.extract_strided_slice %186 {offsets = [128, 0], sizes = [8, 8], strides = [1, 1]} : vector<200x8xf32> to vector<8x8xf32>
    %204 = vector.extract_strided_slice %186 {offsets = [136, 0], sizes = [8, 8], strides = [1, 1]} : vector<200x8xf32> to vector<8x8xf32>
    %205 = vector.extract_strided_slice %186 {offsets = [144, 0], sizes = [8, 8], strides = [1, 1]} : vector<200x8xf32> to vector<8x8xf32>
    %206 = vector.extract_strided_slice %186 {offsets = [152, 0], sizes = [8, 8], strides = [1, 1]} : vector<200x8xf32> to vector<8x8xf32>
    %207 = vector.extract_strided_slice %186 {offsets = [160, 0], sizes = [8, 8], strides = [1, 1]} : vector<200x8xf32> to vector<8x8xf32>
    %208 = vector.extract_strided_slice %186 {offsets = [168, 0], sizes = [8, 8], strides = [1, 1]} : vector<200x8xf32> to vector<8x8xf32>
    %209 = vector.extract_strided_slice %186 {offsets = [176, 0], sizes = [8, 8], strides = [1, 1]} : vector<200x8xf32> to vector<8x8xf32>
    %210 = vector.extract_strided_slice %186 {offsets = [184, 0], sizes = [8, 8], strides = [1, 1]} : vector<200x8xf32> to vector<8x8xf32>
    %211 = vector.extract_strided_slice %186 {offsets = [192, 0], sizes = [8, 8], strides = [1, 1]} : vector<200x8xf32> to vector<8x8xf32>
    %212 = tpu.concatenate %187, %188, %189, %190, %191, %192, %193, %194, %195, %196, %197, %198, %199, %200, %201, %202 in 1 : vector<8x8xf32>, vector<8x8xf32>, vector<8x8xf32>, vector<8x8xf32>, vector<8x8xf32>, vector<8x8xf32>, vector<8x8xf32>, vector<8x8xf32>, vector<8x8xf32>, vector<8x8xf32>, vector<8x8xf32>, vector<8x8xf32>, vector<8x8xf32>, vector<8x8xf32>, vector<8x8xf32>, vector<8x8xf32> -> vector<8x128xf32>
    %213 = tpu.concatenate %203, %204, %205, %206, %207, %208, %209, %210, %211 in 1 : vector<8x8xf32>, vector<8x8xf32>, vector<8x8xf32>, vector<8x8xf32>, vector<8x8xf32>, vector<8x8xf32>, vector<8x8xf32>, vector<8x8xf32>, vector<8x8xf32> -> vector<8x72xf32>
    %214 = tpu.concatenate %212, %213 in 1 : vector<8x128xf32>, vector<8x72xf32> -> vector<8x200xf32>
    %c64_54 = arith.constant 64 : index
    %c0_55 = arith.constant 0 : index
    %215 = vector.load %arg2[%c64_54, %c0_55] : memref<296x128xf32, #tpu.memory_space<vmem>>, vector<200x16xf32>
    %cst_56 = arith.constant dense<0.000000e+00> : vector<8x16xf32>
    %216 = tpu.matmul %214, %215, %cst_56 {dimension_numbers = #tpu.dot_dimension_numbers<[1], [0], [0], [1], [0, 0, 1, 1], [], []>} : vector<8x200xf32>, vector<200x16xf32>, vector<8x16xf32> -> vector<8x16xf32>
    %c264_57 = arith.constant 264 : index
    %c0_58 = arith.constant 0 : index
    %217 = vector.load %arg2[%c264_57, %c0_58] : memref<296x128xf32, #tpu.memory_space<vmem>>, vector<1x16xf32>
    %218 = vector.broadcast %217 : vector<1x16xf32> to vector<8x16xf32>
    %219 = arith.addf %216, %218 : vector<8x16xf32>
    %220 = vector.extract_strided_slice %219 {offsets = [0, 0], sizes = [2, 16], strides = [1, 1]} : vector<8x16xf32> to vector<2x16xf32>
    %221 = vector.extract_strided_slice %219 {offsets = [2, 0], sizes = [2, 16], strides = [1, 1]} : vector<8x16xf32> to vector<2x16xf32>
    %222 = arith.maximumf %220, %221 : vector<2x16xf32>
    %223 = vector.extract_strided_slice %219 {offsets = [4, 0], sizes = [2, 16], strides = [1, 1]} : vector<8x16xf32> to vector<2x16xf32>
    %224 = vector.extract_strided_slice %219 {offsets = [6, 0], sizes = [2, 16], strides = [1, 1]} : vector<8x16xf32> to vector<2x16xf32>
    %225 = arith.maximumf %223, %224 : vector<2x16xf32>
    %226 = arith.maximumf %222, %225 : vector<2x16xf32>
    %cst_59 = arith.constant 1.000000e+00 : f32
    %227 = vector.broadcast %cst_59 : f32 to vector<2x16xf32>
    %228 = arith.cmpf ogt, %165, %227 : vector<2x16xf32>
    %229 = arith.extui %228 : vector<2x16xi1> to vector<2x16xi32>
    %230 = arith.sitofp %229 : vector<2x16xi32> to vector<2x16xf32>
    %cst_60 = arith.constant 0.899999976 : f32
    %231 = vector.broadcast %cst_60 : f32 to vector<2x16xf32>
    %232 = arith.mulf %231, %159 : vector<2x16xf32>
    %233 = arith.addf %232, %226 : vector<2x16xf32>
    %cst_61 = arith.constant 8.000000e-01 : f32
    %234 = vector.broadcast %cst_61 : f32 to vector<2x16xf32>
    %235 = arith.mulf %234, %165 : vector<2x16xf32>
    %236 = arith.addf %235, %233 : vector<2x16xf32>
    %cst_62 = arith.constant 1.000000e+00 : f32
    %237 = vector.broadcast %cst_62 : f32 to vector<2x16xf32>
    %238 = arith.mulf %230, %237 : vector<2x16xf32>
    %239 = arith.subf %236, %238 : vector<2x16xf32>
    %cst_63 = arith.constant 1.000000e+00 : f32
    %240 = vector.broadcast %cst_63 : f32 to vector<2x16xf32>
    %241 = arith.cmpf ogt, %239, %240 : vector<2x16xf32>
    %242 = arith.extui %241 : vector<2x16xi1> to vector<2x16xi32>
    %243 = arith.sitofp %242 : vector<2x16xi32> to vector<2x16xf32>
    %c272 = arith.constant 272 : index
    %c0_64 = arith.constant 0 : index
    %244 = vector.load %arg2[%c272, %c0_64] : memref<296x128xf32, #tpu.memory_space<vmem>>, vector<16x128xf32>
    %cst_65 = arith.constant dense<0.000000e+00> : vector<2x128xf32>
    %245 = tpu.matmul %243, %244, %cst_65 {dimension_numbers = #tpu.dot_dimension_numbers<[1], [0], [0], [1], [0, 0, 1, 1], [], []>} : vector<2x16xf32>, vector<16x128xf32>, vector<2x128xf32> -> vector<2x128xf32>
    %c288 = arith.constant 288 : index
    %c0_66 = arith.constant 0 : index
    %246 = vector.load %arg2[%c288, %c0_66] : memref<296x128xf32, #tpu.memory_space<vmem>>, vector<1x128xf32>
    %247 = vector.broadcast %246 : vector<1x128xf32> to vector<2x128xf32>
    %248 = arith.addf %245, %247 : vector<2x128xf32>
    %c0_67 = arith.constant 0 : index
    %c0_68 = arith.constant 0 : index
    %249 = vector.load %arg3[%c0_67, %c0_68] : memref<2x128xf32, #tpu.memory_space<vmem>>, vector<2x128xf32>
    tpu.vector_store %arg3[%c0_67, %c0_68], %248 {strides = array<i32>} : memref<2x128xf32, #tpu.memory_space<vmem>>, vector<2x128xf32>,
    return
  }
}

</mosaic_0001>

<llo_original>
// kernel: scnn_forward.1
$region0: #{scnn_forward.1}
  #allocation0 [shape = 'u32[]', space=smem, size = 0x4, offset = 0x4, fixed_abs, tag = 'smem constant byte address 0x4 - core index']
  #allocation1 [shape = 'u32[144,128]{1,0:T(1,128)}', space=vmem, size = 0x12000, scoped, tag = 'internal scratch']
  #allocation2 [shape = 'f32[216,8]{1,0:T(8,128)}', space=vmem, size = 0x1b000, scoped, tag = 'scratch operand']
  %s0 = inlined_call_operand.vmem [shape: f32[864,50], index: 0, kind: input, shape index: {}]
  %s1 = inlined_call_operand.vmem [shape: bf16[200,72], index: 1, kind: input, shape index: {}]
  %s2 = inlined_call_operand.vmem [shape: f32[296,128], index: 2, kind: input, shape index: {}]
  %s3 = inlined_call_operand.hbm [shape: f32[2,128], index: 3, kind: output, shape index: {}]
  %s4 = sld [smem:[#allocation0]]
  $region22: #{scnn_forward.1} parent=0
    _
  %s6 = ssub.s32 1, %s4
  %s7 = scalar_select 0, %s6, %s4
  $region1: #{scnn_forward.1} parent=0
    #allocation3 [shape = 'u8[1024]{0}', space=vmem, size = 0x400, scoped, tag = 'output window, operand 0, single buffered']
    #allocation4 [shape = 's32[1]{0}', space=sflag, size = 0x4, scoped, tag = 'scoped memory for scnn_forward.1']
    %8 = vsyncpa [#allocation4], 0
    // Predicated region
    $region2: #{scnn_forward.1} parent=1 // pred_check
      _
    $region3: #{scnn_forward.1} parent=1 // pred_check_branch
      %10 = sbr.rel (0) target = $region5
    $region4: #{scnn_forward.1} parent=1 // pred_region
      _
    $region5: #{scnn_forward.1} parent=1 // pred_fallthru
      _
    // Predicated region
    $region6: #{scnn_forward.1} parent=1 // pred_check
      _
    $region7: #{scnn_forward.1} parent=1 // pred_check_branch
      %12 = sbr.rel (0) target = $region9
    $region8: #{scnn_forward.1} parent=1 // pred_region
      _
    $region9: #{scnn_forward.1} parent=1 // pred_fallthru
      _
    // Predicated region
    $region10: #{scnn_forward.1} parent=1 // pred_check
      _
    $region11: #{scnn_forward.1} parent=1 // pred_check_branch
      %14 = sbr.rel (0) target = $region13
    $region12: #{scnn_forward.1} parent=1 // pred_region
      _
    $region13: #{scnn_forward.1} parent=1 // pred_fallthru
      _
    %v16 = vld [vmem:[%s0] sm:$0xff]
    %v17 = vld [vmem:[%s0 + $0x8] sm:$0xff]
    %v18 = vld [vmem:[%s0 + $0x10] sm:$0xff]
    %v19 = vld [vmem:[%s0 + $0x18] sm:$0xff]
    %v20 = vld [vmem:[%s0 + $0x20] sm:$0xff]
    %v21 = vld [vmem:[%s0 + $0x28] sm:$0xff]
    %v22 = vld [vmem:[%s0 + $0x30] sm:$0xff]
    %v23 = vld [vmem:[%s0 + $0x38] sm:$0xff]
    %v24 = vld [vmem:[%s0 + $0x40] sm:$0xff]
    %v25 = vld [vmem:[%s0 + $0x48] sm:$0xff]
    %v26 = vld [vmem:[%s0 + $0x50] sm:$0xff]
    %v27 = vld [vmem:[%s0 + $0x58] sm:$0xff]
    %v28 = vld [vmem:[%s0 + $0x60] sm:$0xff]
    %v29 = vld [vmem:[%s0 + $0x68] sm:$0xff]
    %v30 = vld [vmem:[%s0 + $0x70] sm:$0xff]
    %v31 = vld [vmem:[%s0 + $0x78] sm:$0xff]
    %v32 = vld [vmem:[%s0 + $0x80] sm:$0xff]
    %v33 = vld [vmem:[%s0 + $0x88] sm:$0xff]
    %v34 = vld [vmem:[%s0 + $0x90] sm:$0xff]
    %v35 = vld [vmem:[%s0 + $0x98] sm:$0xff]
    %v36 = vld [vmem:[%s0 + $0xa0] sm:$0xff]
    %v37 = vld [vmem:[%s0 + $0xa8] sm:$0xff]
    %v38 = vld [vmem:[%s0 + $0xb0] sm:$0xff]
    %v39 = vld [vmem:[%s0 + $0xb8] sm:$0xff]
    %v40 = vld [vmem:[%s0 + $0xc0] sm:$0xff]
    %v41 = vld [vmem:[%s0 + $0xc8] sm:$0xff]
    %v42 = vld [vmem:[%s0 + $0xd0] sm:$0xff]
    %v43 = vld [vmem:[%s0 + $0xd8] sm:$0xff]
    %v44 = vld [vmem:[%s0 + $0xe0] sm:$0xff]
    %v45 = vld [vmem:[%s0 + $0xe8] sm:$0xff]
    %v46 = vld [vmem:[%s0 + $0xf0] sm:$0xff]
    %v47 = vld [vmem:[%s0 + $0xf8] sm:$0xff]
    %v48 = vld [vmem:[%s0 + $0x100] sm:$0xff]
    %v49 = vld [vmem:[%s0 + $0x108] sm:$0xff]
    %v50 = vld [vmem:[%s0 + $0x110] sm:$0xff]
    %v51 = vld [vmem:[%s0 + $0x118] sm:$0xff]
    %v52 = vld [vmem:[%s0 + $0x120] sm:$0xff]
    %v53 = vld [vmem:[%s0 + $0x128] sm:$0xff]
    %v54 = vld [vmem:[%s0 + $0x130] sm:$0xff]
    %v55 = vld [vmem:[%s0 + $0x138] sm:$0xff]
    %v56 = vld [vmem:[%s0 + $0x140] sm:$0xff]
    %v57 = vld [vmem:[%s0 + $0x148] sm:$0xff]
    %v58 = vld [vmem:[%s0 + $0x150] sm:$0xff]
    %v59 = vld [vmem:[%s0 + $0x158] sm:$0xff]
    %v60 = vld [vmem:[%s0 + $0x160] sm:$0xff]
    %v61 = vld [vmem:[%s0 + $0x168] sm:$0xff]
    %v62 = vld [vmem:[%s0 + $0x170] sm:$0xff]
    %v63 = vld [vmem:[%s0 + $0x178] sm:$0xff]
    %v64 = vld [vmem:[%s0 + $0x180] sm:$0xff]
    %v65 = vld [vmem:[%s0 + $0x188] sm:$0xff]
    %v66 = vld [vmem:[%s0 + $0x190] sm:$0xff]
    %v67 = vld [vmem:[%s0 + $0x198] sm:$0xff]
    %v68 = vld [vmem:[%s0 + $0x1a0] sm:$0xff]
    %v69 = vld [vmem:[%s0 + $0x1a8] sm:$0xff]
    %v70 = vld [vmem:[%s0 + $0x1b0] sm:$0xff]
    %v71 = vld [vmem:[%s0 + $0x1b8] sm:$0xff]
    %v72 = vld [vmem:[%s0 + $0x1c0] sm:$0xff]
    %v73 = vld [vmem:[%s0 + $0x1c8] sm:$0xff]
    %v74 = vld [vmem:[%s0 + $0x1d0] sm:$0xff]
    %v75 = vld [vmem:[%s0 + $0x1d8] sm:$0xff]
    %v76 = vld [vmem:[%s0 + $0x1e0] sm:$0xff]
    %v77 = vld [vmem:[%s0 + $0x1e8] sm:$0xff]
    %v78 = vld [vmem:[%s0 + $0x1f0] sm:$0xff]
    %v79 = vld [vmem:[%s0 + $0x1f8] sm:$0xff]
    %v80 = vld [vmem:[%s0 + $0x200] sm:$0xff]
    %v81 = vld [vmem:[%s0 + $0x208] sm:$0xff]
    %v82 = vld [vmem:[%s0 + $0x210] sm:$0xff]
    %v83 = vld [vmem:[%s0 + $0x218] sm:$0xff]
    %v84 = vld [vmem:[%s0 + $0x220] sm:$0xff]
    %v85 = vld [vmem:[%s0 + $0x228] sm:$0xff]
    %v86 = vld [vmem:[%s0 + $0x230] sm:$0xff]
    %v87 = vld [vmem:[%s0 + $0x238] sm:$0xff]
    %v88 = vld [vmem:[%s0 + $0x240] sm:$0xff]
    %v89 = vld [vmem:[%s0 + $0x248] sm:$0xff]
    %v90 = vld [vmem:[%s0 + $0x250] sm:$0xff]
    %v91 = vld [vmem:[%s0 + $0x258] sm:$0xff]
    %v92 = vld [vmem:[%s0 + $0x260] sm:$0xff]
    %v93 = vld [vmem:[%s0 + $0x268] sm:$0xff]
    %v94 = vld [vmem:[%s0 + $0x270] sm:$0xff]
    %v95 = vld [vmem:[%s0 + $0x278] sm:$0xff]
    %v96 = vld [vmem:[%s0 + $0x280] sm:$0xff]
    %v97 = vld [vmem:[%s0 + $0x288] sm:$0xff]
    %v98 = vld [vmem:[%s0 + $0x290] sm:$0xff]
    %v99 = vld [vmem:[%s0 + $0x298] sm:$0xff]
    %v100 = vld [vmem:[%s0 + $0x2a0] sm:$0xff]
    %v101 = vld [vmem:[%s0 + $0x2a8] sm:$0xff]
    %v102 = vld [vmem:[%s0 + $0x2b0] sm:$0xff]
    %v103 = vld [vmem:[%s0 + $0x2b8] sm:$0xff]
    %v104 = vld [vmem:[%s0 + $0x2c0] sm:$0xff]
    %v105 = vld [vmem:[%s0 + $0x2c8] sm:$0xff]
    %v106 = vld [vmem:[%s0 + $0x2d0] sm:$0xff]
    %v107 = vld [vmem:[%s0 + $0x2d8] sm:$0xff]
    %v108 = vld [vmem:[%s0 + $0x2e0] sm:$0xff]
    %v109 = vld [vmem:[%s0 + $0x2e8] sm:$0xff]
    %v110 = vld [vmem:[%s0 + $0x2f0] sm:$0xff]
    %v111 = vld [vmem:[%s0 + $0x2f8] sm:$0xff]
    %v112 = vld [vmem:[%s0 + $0x300] sm:$0xff]
    %v113 = vld [vmem:[%s0 + $0x308] sm:$0xff]
    %v114 = vld [vmem:[%s0 + $0x310] sm:$0xff]
    %v115 = vld [vmem:[%s0 + $0x318] sm:$0xff]
    %v116 = vld [vmem:[%s0 + $0x320] sm:$0xff]
    %v117 = vld [vmem:[%s0 + $0x328] sm:$0xff]
    %v118 = vld [vmem:[%s0 + $0x330] sm:$0xff]
    %v119 = vld [vmem:[%s0 + $0x338] sm:$0xff]
    %v120 = vld [vmem:[%s0 + $0x340] sm:$0xff]
    %v121 = vld [vmem:[%s0 + $0x348] sm:$0xff]
    %v122 = vld [vmem:[%s0 + $0x350] sm:$0xff]
    %v123 = vld [vmem:[%s0 + $0x358] sm:$0xff]
    %v124 = vld [vmem:[%s2] sm:$0xff]
    %v125 = vld [vmem:[%s2 + $0x8] sm:$0xff]
    %v126 = vld [vmem:[%s2 + $0x10] sm:$0xff]
    %v127 = vld [vmem:[%s2 + $0x18] sm:$0xff]
    %v128 = vld [vmem:[%s2 + $0x20] sm:$0xff]
    %v129 = vld [vmem:[%s2 + $0x28] sm:$0xff]
    %v130 = vld [vmem:[%s2 + $0x30] sm:$0x3]
    %vm131 = vcmask 408576
    %v133 = vsel %vm131, %v16, 0
    %v136 = vsel %vm131, %v17, 0
    %v139 = vsel %vm131, %v18, 0
    %v142 = vsel %vm131, %v19, 0
    %v145 = vsel %vm131, %v20, 0
    %v148 = vsel %vm131, %v21, 0
    %v151 = vsel %vm131, %v22, 0
    %v154 = vsel %vm131, %v23, 0
    %v157 = vsel %vm131, %v24, 0
    %v160 = vsel %vm131, %v25, 0
    %v163 = vsel %vm131, %v26, 0
    %v166 = vsel %vm131, %v27, 0
    %v169 = vsel %vm131, %v28, 0
    %v172 = vsel %vm131, %v29, 0
    %v175 = vsel %vm131, %v30, 0
    %v178 = vsel %vm131, %v31, 0
    %v181 = vsel %vm131, %v32, 0
    %v184 = vsel %vm131, %v33, 0
    %v187 = vsel %vm131, %v34, 0
    %v190 = vsel %vm131, %v35, 0
    %v193 = vsel %vm131, %v36, 0
    %v196 = vsel %vm131, %v37, 0
    %v199 = vsel %vm131, %v38, 0
    %v202 = vsel %vm131, %v39, 0
    %v205 = vsel %vm131, %v40, 0
    %v208 = vsel %vm131, %v41, 0
    %v211 = vsel %vm131, %v42, 0
    %v214 = vsel %vm131, %v43, 0
    %v217 = vsel %vm131, %v44, 0
    %v220 = vsel %vm131, %v45, 0
    %v223 = vsel %vm131, %v46, 0
    %v226 = vsel %vm131, %v47, 0
    %v229 = vsel %vm131, %v48, 0
    %v232 = vsel %vm131, %v49, 0
    %v235 = vsel %vm131, %v50, 0
    %v238 = vsel %vm131, %v51, 0
    %v241 = vsel %vm131, %v52, 0
    %v244 = vsel %vm131, %v53, 0
    %v247 = vsel %vm131, %v54, 0
    %v250 = vsel %vm131, %v55, 0
    %v253 = vsel %vm131, %v56, 0
    %v256 = vsel %vm131, %v57, 0
    %v259 = vsel %vm131, %v58, 0
    %v262 = vsel %vm131, %v59, 0
    %v265 = vsel %vm131, %v60, 0
    %v268 = vsel %vm131, %v61, 0
    %v271 = vsel %vm131, %v62, 0
    %v274 = vsel %vm131, %v63, 0
    %v277 = vsel %vm131, %v64, 0
    %v280 = vsel %vm131, %v65, 0
    %v283 = vsel %vm131, %v66, 0
    %v286 = vsel %vm131, %v67, 0
    %v289 = vsel %vm131, %v68, 0
    %v292 = vsel %vm131, %v69, 0
    %v295 = vsel %vm131, %v70, 0
    %v298 = vsel %vm131, %v71, 0
    %v301 = vsel %vm131, %v72, 0
    %v304 = vsel %vm131, %v73, 0
    %v307 = vsel %vm131, %v74, 0
    %v310 = vsel %vm131, %v75, 0
    %v313 = vsel %vm131, %v76, 0
    %v316 = vsel %vm131, %v77, 0
    %v319 = vsel %vm131, %v78, 0
    %v322 = vsel %vm131, %v79, 0
    %v325 = vsel %vm131, %v80, 0
    %v328 = vsel %vm131, %v81, 0
    %v331 = vsel %vm131, %v82, 0
    %v334 = vsel %vm131, %v83, 0
    %v337 = vsel %vm131, %v84, 0
    %v340 = vsel %vm131, %v85, 0
    %v343 = vsel %vm131, %v86, 0
    %v346 = vsel %vm131, %v87, 0
    %v349 = vsel %vm131, %v88, 0
    %v352 = vsel %vm131, %v89, 0
    %v355 = vsel %vm131, %v90, 0
    %v358 = vsel %vm131, %v91, 0
    %v361 = vsel %vm131, %v92, 0
    %v364 = vsel %vm131, %v93, 0
    %v367 = vsel %vm131, %v94, 0
    %v370 = vsel %vm131, %v95, 0
    %v373 = vsel %vm131, %v96, 0
    %v376 = vsel %vm131, %v97, 0
    %v379 = vsel %vm131, %v98, 0
    %v382 = vsel %vm131, %v99, 0
    %v385 = vsel %vm131, %v100, 0
    %v388 = vsel %vm131, %v101, 0
    %v391 = vsel %vm131, %v102, 0
    %v394 = vsel %vm131, %v103, 0
    %v397 = vsel %vm131, %v104, 0
    %v400 = vsel %vm131, %v105, 0
    %v403 = vsel %vm131, %v106, 0
    %v406 = vsel %vm131, %v107, 0
    %v409 = vsel %vm131, %v108, 0
    %v412 = vsel %vm131, %v109, 0
    %v415 = vsel %vm131, %v110, 0
    %v418 = vsel %vm131, %v111, 0
    %v421 = vsel %vm131, %v112, 0
    %v424 = vsel %vm131, %v113, 0
    %v427 = vsel %vm131, %v114, 0
    %v430 = vsel %vm131, %v115, 0
    %v433 = vsel %vm131, %v116, 0
    %v436 = vsel %vm131, %v117, 0
    %v439 = vsel %vm131, %v118, 0
    %v442 = vsel %vm131, %v119, 0
    %v445 = vsel %vm131, %v120, 0
    %v448 = vsel %vm131, %v121, 0
    %v451 = vsel %vm131, %v122, 0
    %v454 = vsel %vm131, %v123, 0
    %vm456 = vcmask 1041408
    %v458 = vsel %vm456, %v130, 0
    %460 = vmatprep.subr.mxu0 0.0
    %461 = vmatpush1.msra.mxu0 0.0
    %462 = vmatprep.subr.mxu0 0.0
    %463 = vmatpush1.msra.mxu0 0.0
    %464 = vmatprep.subr.mxu0 0.0
    %465 = vmatpush1.msra.mxu0 0.0
    %466 = vmatprep.subr.mxu0 0.0
    %467 = vmatpush1.msra.mxu0 0.0
    %468 = vmatprep.subr.mxu0 0.0
    %469 = vmatpush1.msra.mxu0 0.0
    %470 = vmatprep.subr.mxu0 0.0
    %471 = vmatpush1.msra.mxu0 0.0
    %472 = vmatprep.subr.mxu0 0.0
    %473 = vmatpush1.msra.mxu0 0.0
    %474 = vmatprep.subr.mxu0 0.0
    %475 = vmatpush1.msra.mxu0 0.0
    %476 = vmatprep.subr.mxu0 0.0
    %477 = vmatpush1.msra.mxu0 0.0
    %478 = vmatprep.subr.mxu0 0.0
    %479 = vmatpush1.msra.mxu0 %v458
    %480 = vmatprep.subr.mxu0 0.0
    %481 = vmatpush1.msra.mxu0 %v129
    %482 = vmatprep.subr.mxu0 0.0
    %483 = vmatpush1.msra.mxu0 %v128
    %484 = vmatprep.subr.mxu0 0.0
    %485 = vmatpush1.msra.mxu0 %v127
    %486 = vmatprep.subr.mxu0 0.0
    %487 = vmatpush1.msra.mxu0 %v126
    %488 = vmatprep.subr.mxu0 0.0
    %489 = vmatpush1.msra.mxu0 %v125
    %490 = vmatprep.subr.mxu0 0.0
    %491 = vmatpush1.msra.mxu0 %v124
    %492 = vmatprep.subr.mxu0 0.0
    %493 = vmatpush2.msra.mxu0 0.0
    %494 = vmatprep.subr.mxu0 0.0
    %495 = vmatpush2.msra.mxu0 0.0
    %496 = vmatprep.subr.mxu0 0.0
    %497 = vmatpush2.msra.mxu0 0.0
    %498 = vmatprep.subr.mxu0 0.0
    %499 = vmatpush2.msra.mxu0 0.0
    %500 = vmatprep.subr.mxu0 0.0
    %501 = vmatpush2.msra.mxu0 0.0
    %502 = vmatprep.subr.mxu0 0.0
    %503 = vmatpush2.msra.mxu0 0.0
    %504 = vmatprep.subr.mxu0 0.0
    %505 = vmatpush2.msra.mxu0 0.0
    %506 = vmatprep.subr.mxu0 0.0
    %507 = vmatpush2.msra.mxu0 0.0
    %508 = vmatprep.subr.mxu0 0.0
    %509 = vmatpush2.msra.mxu0 0.0
    %510 = vmatprep.subr.mxu0 0.0
    %511 = vmatpush2.msra.mxu0 0.0
    %512 = vmatprep.subr.mxu0 0.0
    %513 = vmatpush2.msra.mxu0 0.0
    %514 = vmatprep.subr.mxu0 0.0
    %515 = vmatpush2.msra.mxu0 0.0
    %516 = vmatprep.subr.mxu0 0.0
    %517 = vmatpush2.msra.mxu0 0.0
    %518 = vmatprep.subr.mxu0 0.0
    %519 = vmatpush2.msra.mxu0 0.0
    %520 = vmatprep.subr.mxu0 0.0
    %521 = vmatpush2.msra.mxu0 0.0
    %522 = vmatprep.subr.mxu0 0.0
    %523 = vmatpush2.msra.mxu0 0.0
    %524 = vmatprep.mubr.f32.mxu0 0.0
    %525 = vmatmul.mubr.f32.gmra.mxu0 %v133
    %v526 = vpop.f32.mrf.mxu0
    %v527 = vadd.f32 0.0, %v526
    %v528 = vpop.f32.mrf.mxu0
    %529 = vmatprep.mubr.f32.mxu0 0.0
    %530 = vmatmul.mubr.f32.gmra.mxu0 %v136
    %v531 = vpop.f32.mrf.mxu0
    %v532 = vadd.f32 0.0, %v531
    %v533 = vpop.f32.mrf.mxu0
    %534 = vmatprep.mubr.f32.mxu0 0.0
    %535 = vmatmul.mubr.f32.gmra.mxu0 %v139
    %v536 = vpop.f32.mrf.mxu0
    %v537 = vadd.f32 0.0, %v536
    %v538 = vpop.f32.mrf.mxu0
    %539 = vmatprep.mubr.f32.mxu0 0.0
    %540 = vmatmul.mubr.f32.gmra.mxu0 %v142
    %v541 = vpop.f32.mrf.mxu0
    %v542 = vadd.f32 0.0, %v541
    %v543 = vpop.f32.mrf.mxu0
    %544 = vmatprep.mubr.f32.mxu0 0.0
    %545 = vmatmul.mubr.f32.gmra.mxu0 %v145
    %v546 = vpop.f32.mrf.mxu0
    %v547 = vadd.f32 0.0, %v546
    %v548 = vpop.f32.mrf.mxu0
    %549 = vmatprep.mubr.f32.mxu0 0.0
    %550 = vmatmul.mubr.f32.gmra.mxu0 %v148
    %v551 = vpop.f32.mrf.mxu0
    %v552 = vadd.f32 0.0, %v551
    %v553 = vpop.f32.mrf.mxu0
    %554 = vmatprep.mubr.f32.mxu0 0.0
    %555 = vmatmul.mubr.f32.gmra.mxu0 %v151
    %v556 = vpop.f32.mrf.mxu0
    %v557 = vadd.f32 0.0, %v556
    %v558 = vpop.f32.mrf.mxu0
    %559 = vmatprep.mubr.f32.mxu0 0.0
    %560 = vmatmul.mubr.f32.gmra.mxu0 %v154
    %v561 = vpop.f32.mrf.mxu0
    %v562 = vadd.f32 0.0, %v561
    %v563 = vpop.f32.mrf.mxu0
    %564 = vmatprep.mubr.f32.mxu0 0.0
    %565 = vmatmul.mubr.f32.gmra.mxu0 %v157
    %v566 = vpop.f32.mrf.mxu0
    %v567 = vadd.f32 0.0, %v566
    %v568 = vpop.f32.mrf.mxu0
    %569 = vmatprep.mubr.f32.mxu0 0.0
    %570 = vmatmul.mubr.f32.gmra.mxu0 %v160
    %v571 = vpop.f32.mrf.mxu0
    %v572 = vadd.f32 0.0, %v571
    %v573 = vpop.f32.mrf.mxu0
    %574 = vmatprep.mubr.f32.mxu0 0.0
    %575 = vmatmul.mubr.f32.gmra.mxu0 %v163
    %v576 = vpop.f32.mrf.mxu0
    %v577 = vadd.f32 0.0, %v576
    %v578 = vpop.f32.mrf.mxu0
    %579 = vmatprep.mubr.f32.mxu0 0.0
    %580 = vmatmul.mubr.f32.gmra.mxu0 %v166
    %v581 = vpop.f32.mrf.mxu0
    %v582 = vadd.f32 0.0, %v581
    %v583 = vpop.f32.mrf.mxu0
    %584 = vmatprep.mubr.f32.mxu0 0.0
    %585 = vmatmul.mubr.f32.gmra.mxu0 %v169
    %v586 = vpop.f32.mrf.mxu0
    %v587 = vadd.f32 0.0, %v586
    %v588 = vpop.f32.mrf.mxu0
    %589 = vmatprep.mubr.f32.mxu0 0.0
    %590 = vmatmul.mubr.f32.gmra.mxu0 %v172
    %v591 = vpop.f32.mrf.mxu0
    %v592 = vadd.f32 0.0, %v591
    %v593 = vpop.f32.mrf.mxu0
    %594 = vmatprep.mubr.f32.mxu0 0.0
    %595 = vmatmul.mubr.f32.gmra.mxu0 %v175
    %v596 = vpop.f32.mrf.mxu0
    %v597 = vadd.f32 0.0, %v596
    %v598 = vpop.f32.mrf.mxu0
    %599 = vmatprep.mubr.f32.mxu0 0.0
    %600 = vmatmul.mubr.f32.gmra.mxu0 %v178
    %v601 = vpop.f32.mrf.mxu0
    %v602 = vadd.f32 0.0, %v601
    %v603 = vpop.f32.mrf.mxu0
    %604 = vmatprep.mubr.f32.mxu0 0.0
    %605 = vmatmul.mubr.f32.gmra.mxu0 %v181
    %v606 = vpop.f32.mrf.mxu0
    %v607 = vadd.f32 0.0, %v606
    %v608 = vpop.f32.mrf.mxu0
    %609 = vmatprep.mubr.f32.mxu0 0.0
    %610 = vmatmul.mubr.f32.gmra.mxu0 %v184
    %v611 = vpop.f32.mrf.mxu0
    %v612 = vadd.f32 0.0, %v611
    %v613 = vpop.f32.mrf.mxu0
    %614 = vmatprep.mubr.f32.mxu0 0.0
    %615 = vmatmul.mubr.f32.gmra.mxu0 %v187
    %v616 = vpop.f32.mrf.mxu0
    %v617 = vadd.f32 0.0, %v616
    %v618 = vpop.f32.mrf.mxu0
    %619 = vmatprep.mubr.f32.mxu0 0.0
    %620 = vmatmul.mubr.f32.gmra.mxu0 %v190
    %v621 = vpop.f32.mrf.mxu0
    %v622 = vadd.f32 0.0, %v621
    %v623 = vpop.f32.mrf.mxu0
    %624 = vmatprep.mubr.f32.mxu0 0.0
    %625 = vmatmul.mubr.f32.gmra.mxu0 %v193
    %v626 = vpop.f32.mrf.mxu0
    %v627 = vadd.f32 0.0, %v626
    %v628 = vpop.f32.mrf.mxu0
    %629 = vmatprep.mubr.f32.mxu0 0.0
    %630 = vmatmul.mubr.f32.gmra.mxu0 %v196
    %v631 = vpop.f32.mrf.mxu0
    %v632 = vadd.f32 0.0, %v631
    %v633 = vpop.f32.mrf.mxu0
    %634 = vmatprep.mubr.f32.mxu0 0.0
    %635 = vmatmul.mubr.f32.gmra.mxu0 %v199
    %v636 = vpop.f32.mrf.mxu0
    %v637 = vadd.f32 0.0, %v636
    %v638 = vpop.f32.mrf.mxu0
    %639 = vmatprep.mubr.f32.mxu0 0.0
    %640 = vmatmul.mubr.f32.gmra.mxu0 %v202
    %v641 = vpop.f32.mrf.mxu0
    %v642 = vadd.f32 0.0, %v641
    %v643 = vpop.f32.mrf.mxu0
    %644 = vmatprep.mubr.f32.mxu0 0.0
    %645 = vmatmul.mubr.f32.gmra.mxu0 %v205
    %v646 = vpop.f32.mrf.mxu0
    %v647 = vadd.f32 0.0, %v646
    %v648 = vpop.f32.mrf.mxu0
    %649 = vmatprep.mubr.f32.mxu0 0.0
    %650 = vmatmul.mubr.f32.gmra.mxu0 %v208
    %v651 = vpop.f32.mrf.mxu0
    %v652 = vadd.f32 0.0, %v651
    %v653 = vpop.f32.mrf.mxu0
    %654 = vmatprep.mubr.f32.mxu0 0.0
    %655 = vmatmul.mubr.f32.gmra.mxu0 %v211
    %v656 = vpop.f32.mrf.mxu0
    %v657 = vadd.f32 0.0, %v656
    %v658 = vpop.f32.mrf.mxu0
    %659 = vmatprep.mubr.f32.mxu0 0.0
    %660 = vmatmul.mubr.f32.gmra.mxu0 %v214
    %v661 = vpop.f32.mrf.mxu0
    %v662 = vadd.f32 0.0, %v661
    %v663 = vpop.f32.mrf.mxu0
    %664 = vmatprep.mubr.f32.mxu0 0.0
    %665 = vmatmul.mubr.f32.gmra.mxu0 %v217
    %v666 = vpop.f32.mrf.mxu0
    %v667 = vadd.f32 0.0, %v666
    %v668 = vpop.f32.mrf.mxu0
    %669 = vmatprep.mubr.f32.mxu0 0.0
    %670 = vmatmul.mubr.f32.gmra.mxu0 %v220
    %v671 = vpop.f32.mrf.mxu0
    %v672 = vadd.f32 0.0, %v671
    %v673 = vpop.f32.mrf.mxu0
    %674 = vmatprep.mubr.f32.mxu0 0.0
    %675 = vmatmul.mubr.f32.gmra.mxu0 %v223
    %v676 = vpop.f32.mrf.mxu0
    %v677 = vadd.f32 0.0, %v676
    %v678 = vpop.f32.mrf.mxu0
    %679 = vmatprep.mubr.f32.mxu0 0.0
    %680 = vmatmul.mubr.f32.gmra.mxu0 %v226
    %v681 = vpop.f32.mrf.mxu0
    %v682 = vadd.f32 0.0, %v681
    %v683 = vpop.f32.mrf.mxu0
    %684 = vmatprep.mubr.f32.mxu0 0.0
    %685 = vmatmul.mubr.f32.gmra.mxu0 %v229
    %v686 = vpop.f32.mrf.mxu0
    %v687 = vadd.f32 0.0, %v686
    %v688 = vpop.f32.mrf.mxu0
    %689 = vmatprep.mubr.f32.mxu0 0.0
    %690 = vmatmul.mubr.f32.gmra.mxu0 %v232
    %v691 = vpop.f32.mrf.mxu0
    %v692 = vadd.f32 0.0, %v691
    %v693 = vpop.f32.mrf.mxu0
    %694 = vmatprep.mubr.f32.mxu0 0.0
    %695 = vmatmul.mubr.f32.gmra.mxu0 %v235
    %v696 = vpop.f32.mrf.mxu0
    %v697 = vadd.f32 0.0, %v696
    %v698 = vpop.f32.mrf.mxu0
    %699 = vmatprep.mubr.f32.mxu0 0.0
    %700 = vmatmul.mubr.f32.gmra.mxu0 %v238
    %v701 = vpop.f32.mrf.mxu0
    %v702 = vadd.f32 0.0, %v701
    %v703 = vpop.f32.mrf.mxu0
    %704 = vmatprep.mubr.f32.mxu0 0.0
    %705 = vmatmul.mubr.f32.gmra.mxu0 %v241
    %v706 = vpop.f32.mrf.mxu0
    %v707 = vadd.f32 0.0, %v706
    %v708 = vpop.f32.mrf.mxu0
    %709 = vmatprep.mubr.f32.mxu0 0.0
    %710 = vmatmul.mubr.f32.gmra.mxu0 %v244
    %v711 = vpop.f32.mrf.mxu0
    %v712 = vadd.f32 0.0, %v711
    %v713 = vpop.f32.mrf.mxu0
    %714 = vmatprep.mubr.f32.mxu0 0.0
    %715 = vmatmul.mubr.f32.gmra.mxu0 %v247
    %v716 = vpop.f32.mrf.mxu0
    %v717 = vadd.f32 0.0, %v716
    %v718 = vpop.f32.mrf.mxu0
    %719 = vmatprep.mubr.f32.mxu0 0.0
    %720 = vmatmul.mubr.f32.gmra.mxu0 %v250
    %v721 = vpop.f32.mrf.mxu0
    %v722 = vadd.f32 0.0, %v721
    %v723 = vpop.f32.mrf.mxu0
    %724 = vmatprep.mubr.f32.mxu0 0.0
    %725 = vmatmul.mubr.f32.gmra.mxu0 %v253
    %v726 = vpop.f32.mrf.mxu0
    %v727 = vadd.f32 0.0, %v726
    %v728 = vpop.f32.mrf.mxu0
    %729 = vmatprep.mubr.f32.mxu0 0.0
    %730 = vmatmul.mubr.f32.gmra.mxu0 %v256
    %v731 = vpop.f32.mrf.mxu0
    %v732 = vadd.f32 0.0, %v731
    %v733 = vpop.f32.mrf.mxu0
    %734 = vmatprep.mubr.f32.mxu0 0.0
    %735 = vmatmul.mubr.f32.gmra.mxu0 %v259
    %v736 = vpop.f32.mrf.mxu0
    %v737 = vadd.f32 0.0, %v736
    %v738 = vpop.f32.mrf.mxu0
    %739 = vmatprep.mubr.f32.mxu0 0.0
    %740 = vmatmul.mubr.f32.gmra.mxu0 %v262
    %v741 = vpop.f32.mrf.mxu0
    %v742 = vadd.f32 0.0, %v741
    %v743 = vpop.f32.mrf.mxu0
    %744 = vmatprep.mubr.f32.mxu0 0.0
    %745 = vmatmul.mubr.f32.gmra.mxu0 %v265
    %v746 = vpop.f32.mrf.mxu0
    %v747 = vadd.f32 0.0, %v746
    %v748 = vpop.f32.mrf.mxu0
    %749 = vmatprep.mubr.f32.mxu0 0.0
    %750 = vmatmul.mubr.f32.gmra.mxu0 %v268
    %v751 = vpop.f32.mrf.mxu0
    %v752 = vadd.f32 0.0, %v751
    %v753 = vpop.f32.mrf.mxu0
    %754 = vmatprep.mubr.f32.mxu0 0.0
    %755 = vmatmul.mubr.f32.gmra.mxu0 %v271
    %v756 = vpop.f32.mrf.mxu0
    %v757 = vadd.f32 0.0, %v756
    %v758 = vpop.f32.mrf.mxu0
    %759 = vmatprep.mubr.f32.mxu0 0.0
    %760 = vmatmul.mubr.f32.gmra.mxu0 %v274
    %v761 = vpop.f32.mrf.mxu0
    %v762 = vadd.f32 0.0, %v761
    %v763 = vpop.f32.mrf.mxu0
    %764 = vmatprep.mubr.f32.mxu0 0.0
    %765 = vmatmul.mubr.f32.gmra.mxu0 %v277
    %v766 = vpop.f32.mrf.mxu0
    %v767 = vadd.f32 0.0, %v766
    %v768 = vpop.f32.mrf.mxu0
    %769 = vmatprep.mubr.f32.mxu0 0.0
    %770 = vmatmul.mubr.f32.gmra.mxu0 %v280
    %v771 = vpop.f32.mrf.mxu0
    %v772 = vadd.f32 0.0, %v771
    %v773 = vpop.f32.mrf.mxu0
    %774 = vmatprep.mubr.f32.mxu0 0.0
    %775 = vmatmul.mubr.f32.gmra.mxu0 %v283
    %v776 = vpop.f32.mrf.mxu0
    %v777 = vadd.f32 0.0, %v776
    %v778 = vpop.f32.mrf.mxu0
    %779 = vmatprep.mubr.f32.mxu0 0.0
    %780 = vmatmul.mubr.f32.gmra.mxu0 %v286
    %v781 = vpop.f32.mrf.mxu0
    %v782 = vadd.f32 0.0, %v781
    %v783 = vpop.f32.mrf.mxu0
    %784 = vmatprep.mubr.f32.mxu0 0.0
    %785 = vmatmul.mubr.f32.gmra.mxu0 %v289
    %v786 = vpop.f32.mrf.mxu0
    %v787 = vadd.f32 0.0, %v786
    %v788 = vpop.f32.mrf.mxu0
    %789 = vmatprep.mubr.f32.mxu0 0.0
    %790 = vmatmul.mubr.f32.gmra.mxu0 %v292
    %v791 = vpop.f32.mrf.mxu0
    %v792 = vadd.f32 0.0, %v791
    %v793 = vpop.f32.mrf.mxu0
    %794 = vmatprep.mubr.f32.mxu0 0.0
    %795 = vmatmul.mubr.f32.gmra.mxu0 %v295
    %v796 = vpop.f32.mrf.mxu0
    %v797 = vadd.f32 0.0, %v796
    %v798 = vpop.f32.mrf.mxu0
    %799 = vmatprep.mubr.f32.mxu0 0.0
    %800 = vmatmul.mubr.f32.gmra.mxu0 %v298
    %v801 = vpop.f32.mrf.mxu0
    %v802 = vadd.f32 0.0, %v801
    %v803 = vpop.f32.mrf.mxu0
    %804 = vmatprep.mubr.f32.mxu0 0.0
    %805 = vmatmul.mubr.f32.gmra.mxu0 %v301
    %v806 = vpop.f32.mrf.mxu0
    %v807 = vadd.f32 0.0, %v806
    %v808 = vpop.f32.mrf.mxu0
    %809 = vmatprep.mubr.f32.mxu0 0.0
    %810 = vmatmul.mubr.f32.gmra.mxu0 %v304
    %v811 = vpop.f32.mrf.mxu0
    %v812 = vadd.f32 0.0, %v811
    %v813 = vpop.f32.mrf.mxu0
    %814 = vmatprep.mubr.f32.mxu0 0.0
    %815 = vmatmul.mubr.f32.gmra.mxu0 %v307
    %v816 = vpop.f32.mrf.mxu0
    %v817 = vadd.f32 0.0, %v816
    %v818 = vpop.f32.mrf.mxu0
    %819 = vmatprep.mubr.f32.mxu0 0.0
    %820 = vmatmul.mubr.f32.gmra.mxu0 %v310
    %v821 = vpop.f32.mrf.mxu0
    %v822 = vadd.f32 0.0, %v821
    %v823 = vpop.f32.mrf.mxu0
    %824 = vmatprep.mubr.f32.mxu0 0.0
    %825 = vmatmul.mubr.f32.gmra.mxu0 %v313
    %v826 = vpop.f32.mrf.mxu0
    %v827 = vadd.f32 0.0, %v826
    %v828 = vpop.f32.mrf.mxu0
    %829 = vmatprep.mubr.f32.mxu0 0.0
    %830 = vmatmul.mubr.f32.gmra.mxu0 %v316
    %v831 = vpop.f32.mrf.mxu0
    %v832 = vadd.f32 0.0, %v831
    %v833 = vpop.f32.mrf.mxu0
    %834 = vmatprep.mubr.f32.mxu0 0.0
    %835 = vmatmul.mubr.f32.gmra.mxu0 %v319
    %v836 = vpop.f32.mrf.mxu0
    %v837 = vadd.f32 0.0, %v836
    %v838 = vpop.f32.mrf.mxu0
    %839 = vmatprep.mubr.f32.mxu0 0.0
    %840 = vmatmul.mubr.f32.gmra.mxu0 %v322
    %v841 = vpop.f32.mrf.mxu0
    %v842 = vadd.f32 0.0, %v841
    %v843 = vpop.f32.mrf.mxu0
    %844 = vmatprep.mubr.f32.mxu0 0.0
    %845 = vmatmul.mubr.f32.gmra.mxu0 %v325
    %v846 = vpop.f32.mrf.mxu0
    %v847 = vadd.f32 0.0, %v846
    %v848 = vpop.f32.mrf.mxu0
    %849 = vmatprep.mubr.f32.mxu0 0.0
    %850 = vmatmul.mubr.f32.gmra.mxu0 %v328
    %v851 = vpop.f32.mrf.mxu0
    %v852 = vadd.f32 0.0, %v851
    %v853 = vpop.f32.mrf.mxu0
    %854 = vmatprep.mubr.f32.mxu0 0.0
    %855 = vmatmul.mubr.f32.gmra.mxu0 %v331
    %v856 = vpop.f32.mrf.mxu0
    %v857 = vadd.f32 0.0, %v856
    %v858 = vpop.f32.mrf.mxu0
    %859 = vmatprep.mubr.f32.mxu0 0.0
    %860 = vmatmul.mubr.f32.gmra.mxu0 %v334
    %v861 = vpop.f32.mrf.mxu0
    %v862 = vadd.f32 0.0, %v861
    %v863 = vpop.f32.mrf.mxu0
    %864 = vmatprep.mubr.f32.mxu0 0.0
    %865 = vmatmul.mubr.f32.gmra.mxu0 %v337
    %v866 = vpop.f32.mrf.mxu0
    %v867 = vadd.f32 0.0, %v866
    %v868 = vpop.f32.mrf.mxu0
    %869 = vmatprep.mubr.f32.mxu0 0.0
    %870 = vmatmul.mubr.f32.gmra.mxu0 %v340
    %v871 = vpop.f32.mrf.mxu0
    %v872 = vadd.f32 0.0, %v871
    %v873 = vpop.f32.mrf.mxu0
    %874 = vmatprep.mubr.f32.mxu0 0.0
    %875 = vmatmul.mubr.f32.gmra.mxu0 %v343
    %v876 = vpop.f32.mrf.mxu0
    %v877 = vadd.f32 0.0, %v876
    %v878 = vpop.f32.mrf.mxu0
    %879 = vmatprep.mubr.f32.mxu0 0.0
    %880 = vmatmul.mubr.f32.gmra.mxu0 %v346
    %v881 = vpop.f32.mrf.mxu0
    %v882 = vadd.f32 0.0, %v881
    %v883 = vpop.f32.mrf.mxu0
    %884 = vmatprep.mubr.f32.mxu0 0.0
    %885 = vmatmul.mubr.f32.gmra.mxu0 %v349
    %v886 = vpop.f32.mrf.mxu0
    %v887 = vadd.f32 0.0, %v886
    %v888 = vpop.f32.mrf.mxu0
    %889 = vmatprep.mubr.f32.mxu0 0.0
    %890 = vmatmul.mubr.f32.gmra.mxu0 %v352
    %v891 = vpop.f32.mrf.mxu0
    %v892 = vadd.f32 0.0, %v891
    %v893 = vpop.f32.mrf.mxu0
    %894 = vmatprep.mubr.f32.mxu0 0.0
    %895 = vmatmul.mubr.f32.gmra.mxu0 %v355
    %v896 = vpop.f32.mrf.mxu0
    %v897 = vadd.f32 0.0, %v896
    %v898 = vpop.f32.mrf.mxu0
    %899 = vmatprep.mubr.f32.mxu0 0.0
    %900 = vmatmul.mubr.f32.gmra.mxu0 %v358
    %v901 = vpop.f32.mrf.mxu0
    %v902 = vadd.f32 0.0, %v901
    %v903 = vpop.f32.mrf.mxu0
    %904 = vmatprep.mubr.f32.mxu0 0.0
    %905 = vmatmul.mubr.f32.gmra.mxu0 %v361
    %v906 = vpop.f32.mrf.mxu0
    %v907 = vadd.f32 0.0, %v906
    %v908 = vpop.f32.mrf.mxu0
    %909 = vmatprep.mubr.f32.mxu0 0.0
    %910 = vmatmul.mubr.f32.gmra.mxu0 %v364
    %v911 = vpop.f32.mrf.mxu0
    %v912 = vadd.f32 0.0, %v911
    %v913 = vpop.f32.mrf.mxu0
    %914 = vmatprep.mubr.f32.mxu0 0.0
    %915 = vmatmul.mubr.f32.gmra.mxu0 %v367
    %v916 = vpop.f32.mrf.mxu0
    %v917 = vadd.f32 0.0, %v916
    %v918 = vpop.f32.mrf.mxu0
    %919 = vmatprep.mubr.f32.mxu0 0.0
    %920 = vmatmul.mubr.f32.gmra.mxu0 %v370
    %v921 = vpop.f32.mrf.mxu0
    %v922 = vadd.f32 0.0, %v921
    %v923 = vpop.f32.mrf.mxu0
    %924 = vmatprep.mubr.f32.mxu0 0.0
    %925 = vmatmul.mubr.f32.gmra.mxu0 %v373
    %v926 = vpop.f32.mrf.mxu0
    %v927 = vadd.f32 0.0, %v926
    %v928 = vpop.f32.mrf.mxu0
    %929 = vmatprep.mubr.f32.mxu0 0.0
    %930 = vmatmul.mubr.f32.gmra.mxu0 %v376
    %v931 = vpop.f32.mrf.mxu0
    %v932 = vadd.f32 0.0, %v931
    %v933 = vpop.f32.mrf.mxu0
    %934 = vmatprep.mubr.f32.mxu0 0.0
    %935 = vmatmul.mubr.f32.gmra.mxu0 %v379
    %v936 = vpop.f32.mrf.mxu0
    %v937 = vadd.f32 0.0, %v936
    %v938 = vpop.f32.mrf.mxu0
    %939 = vmatprep.mubr.f32.mxu0 0.0
    %940 = vmatmul.mubr.f32.gmra.mxu0 %v382
    %v941 = vpop.f32.mrf.mxu0
    %v942 = vadd.f32 0.0, %v941
    %v943 = vpop.f32.mrf.mxu0
    %944 = vmatprep.mubr.f32.mxu0 0.0
    %945 = vmatmul.mubr.f32.gmra.mxu0 %v385
    %v946 = vpop.f32.mrf.mxu0
    %v947 = vadd.f32 0.0, %v946
    %v948 = vpop.f32.mrf.mxu0
    %949 = vmatprep.mubr.f32.mxu0 0.0
    %950 = vmatmul.mubr.f32.gmra.mxu0 %v388
    %v951 = vpop.f32.mrf.mxu0
    %v952 = vadd.f32 0.0, %v951
    %v953 = vpop.f32.mrf.mxu0
    %954 = vmatprep.mubr.f32.mxu0 0.0
    %955 = vmatmul.mubr.f32.gmra.mxu0 %v391
    %v956 = vpop.f32.mrf.mxu0
    %v957 = vadd.f32 0.0, %v956
    %v958 = vpop.f32.mrf.mxu0
    %959 = vmatprep.mubr.f32.mxu0 0.0
    %960 = vmatmul.mubr.f32.gmra.mxu0 %v394
    %v961 = vpop.f32.mrf.mxu0
    %v962 = vadd.f32 0.0, %v961
    %v963 = vpop.f32.mrf.mxu0
    %964 = vmatprep.mubr.f32.mxu0 0.0
    %965 = vmatmul.mubr.f32.gmra.mxu0 %v397
    %v966 = vpop.f32.mrf.mxu0
    %v967 = vadd.f32 0.0, %v966
    %v968 = vpop.f32.mrf.mxu0
    %969 = vmatprep.mubr.f32.mxu0 0.0
    %970 = vmatmul.mubr.f32.gmra.mxu0 %v400
    %v971 = vpop.f32.mrf.mxu0
    %v972 = vadd.f32 0.0, %v971
    %v973 = vpop.f32.mrf.mxu0
    %974 = vmatprep.mubr.f32.mxu0 0.0
    %975 = vmatmul.mubr.f32.gmra.mxu0 %v403
    %v976 = vpop.f32.mrf.mxu0
    %v977 = vadd.f32 0.0, %v976
    %v978 = vpop.f32.mrf.mxu0
    %979 = vmatprep.mubr.f32.mxu0 0.0
    %980 = vmatmul.mubr.f32.gmra.mxu0 %v406
    %v981 = vpop.f32.mrf.mxu0
    %v982 = vadd.f32 0.0, %v981
    %v983 = vpop.f32.mrf.mxu0
    %984 = vmatprep.mubr.f32.mxu0 0.0
    %985 = vmatmul.mubr.f32.gmra.mxu0 %v409
    %v986 = vpop.f32.mrf.mxu0
    %v987 = vadd.f32 0.0, %v986
    %v988 = vpop.f32.mrf.mxu0
    %989 = vmatprep.mubr.f32.mxu0 0.0
    %990 = vmatmul.mubr.f32.gmra.mxu0 %v412
    %v991 = vpop.f32.mrf.mxu0
    %v992 = vadd.f32 0.0, %v991
    %v993 = vpop.f32.mrf.mxu0
    %994 = vmatprep.mubr.f32.mxu0 0.0
    %995 = vmatmul.mubr.f32.gmra.mxu0 %v415
    %v996 = vpop.f32.mrf.mxu0
    %v997 = vadd.f32 0.0, %v996
    %v998 = vpop.f32.mrf.mxu0
    %999 = vmatprep.mubr.f32.mxu0 0.0
    %1000 = vmatmul.mubr.f32.gmra.mxu0 %v418
    %v1001 = vpop.f32.mrf.mxu0
    %v1002 = vadd.f32 0.0, %v1001
    %v1003 = vpop.f32.mrf.mxu0
    %1004 = vmatprep.mubr.f32.mxu0 0.0
    %1005 = vmatmul.mubr.f32.gmra.mxu0 %v421
    %v1006 = vpop.f32.mrf.mxu0
    %v1007 = vadd.f32 0.0, %v1006
    %v1008 = vpop.f32.mrf.mxu0
    %1009 = vmatprep.mubr.f32.mxu0 0.0
    %1010 = vmatmul.mubr.f32.gmra.mxu0 %v424
    %v1011 = vpop.f32.mrf.mxu0
    %v1012 = vadd.f32 0.0, %v1011
    %v1013 = vpop.f32.mrf.mxu0
    %1014 = vmatprep.mubr.f32.mxu0 0.0
    %1015 = vmatmul.mubr.f32.gmra.mxu0 %v427
    %v1016 = vpop.f32.mrf.mxu0
    %v1017 = vadd.f32 0.0, %v1016
    %v1018 = vpop.f32.mrf.mxu0
    %1019 = vmatprep.mubr.f32.mxu0 0.0
    %1020 = vmatmul.mubr.f32.gmra.mxu0 %v430
    %v1021 = vpop.f32.mrf.mxu0
    %v1022 = vadd.f32 0.0, %v1021
    %v1023 = vpop.f32.mrf.mxu0
    %1024 = vmatprep.mubr.f32.mxu0 0.0
    %1025 = vmatmul.mubr.f32.gmra.mxu0 %v433
    %v1026 = vpop.f32.mrf.mxu0
    %v1027 = vadd.f32 0.0, %v1026
    %v1028 = vpop.f32.mrf.mxu0
    %1029 = vmatprep.mubr.f32.mxu0 0.0
    %1030 = vmatmul.mubr.f32.gmra.mxu0 %v436
    %v1031 = vpop.f32.mrf.mxu0
    %v1032 = vadd.f32 0.0, %v1031
    %v1033 = vpop.f32.mrf.mxu0
    %1034 = vmatprep.mubr.f32.mxu0 0.0
    %1035 = vmatmul.mubr.f32.gmra.mxu0 %v439
    %v1036 = vpop.f32.mrf.mxu0
    %v1037 = vadd.f32 0.0, %v1036
    %v1038 = vpop.f32.mrf.mxu0
    %1039 = vmatprep.mubr.f32.mxu0 0.0
    %1040 = vmatmul.mubr.f32.gmra.mxu0 %v442
    %v1041 = vpop.f32.mrf.mxu0
    %v1042 = vadd.f32 0.0, %v1041
    %v1043 = vpop.f32.mrf.mxu0
    %1044 = vmatprep.mubr.f32.mxu0 0.0
    %1045 = vmatmul.mubr.f32.gmra.mxu0 %v445
    %v1046 = vpop.f32.mrf.mxu0
    %v1047 = vadd.f32 0.0, %v1046
    %v1048 = vpop.f32.mrf.mxu0
    %1049 = vmatprep.mubr.f32.mxu0 0.0
    %1050 = vmatmul.mubr.f32.gmra.mxu0 %v448
    %v1051 = vpop.f32.mrf.mxu0
    %v1052 = vadd.f32 0.0, %v1051
    %v1053 = vpop.f32.mrf.mxu0
    %1054 = vmatprep.mubr.f32.mxu0 0.0
    %1055 = vmatmul.mubr.f32.gmra.mxu0 %v451
    %v1056 = vpop.f32.mrf.mxu0
    %v1057 = vadd.f32 0.0, %v1056
    %v1058 = vpop.f32.mrf.mxu0
    %1059 = vmatprep.mubr.f32.mxu0 0.0
    %1060 = vmatmul.mubr.f32.gmra.mxu0 %v454
    %v1061 = vpop.f32.mrf.mxu0
    %v1062 = vadd.f32 0.0, %v1061
    %v1063 = vpop.f32.mrf.mxu0
    %1064 = vdwg.mxu0
    %v1065 = vmax.f32 %v527, %v662
    %v1066 = vmax.f32 %v532, %v667
    %v1067 = vmax.f32 %v537, %v672
    %v1068 = vmax.f32 %v542, %v677
    %v1069 = vmax.f32 %v547, %v682
    %v1070 = vmax.f32 %v552, %v687
    %v1071 = vmax.f32 %v557, %v692
    %v1072 = vmax.f32 %v562, %v697
    %v1073 = vmax.f32 %v567, %v702
    %v1074 = vmax.f32 %v572, %v707
    %v1075 = vmax.f32 %v577, %v712
    %v1076 = vmax.f32 %v582, %v717
    %v1077 = vmax.f32 %v587, %v722
    %v1078 = vmax.f32 %v592, %v727
    %v1079 = vmax.f32 %v597, %v732
    %v1080 = vmax.f32 %v602, %v737
    %v1081 = vmax.f32 %v607, %v742
    %v1082 = vmax.f32 %v612, %v747
    %v1083 = vmax.f32 %v617, %v752
    %v1084 = vmax.f32 %v622, %v757
    %v1085 = vmax.f32 %v627, %v762
    %v1086 = vmax.f32 %v632, %v767
    %v1087 = vmax.f32 %v637, %v772
    %v1088 = vmax.f32 %v642, %v777
    %v1089 = vmax.f32 %v647, %v782
    %v1090 = vmax.f32 %v652, %v787
    %v1091 = vmax.f32 %v657, %v792
    %v1092 = vmax.f32 %v797, %v932
    %v1093 = vmax.f32 %v802, %v937
    %v1094 = vmax.f32 %v807, %v942
    %v1095 = vmax.f32 %v812, %v947
    %v1096 = vmax.f32 %v817, %v952
    %v1097 = vmax.f32 %v822, %v957
    %v1098 = vmax.f32 %v827, %v962
    %v1099 = vmax.f32 %v832, %v967
    %v1100 = vmax.f32 %v837, %v972
    %v1101 = vmax.f32 %v842, %v977
    %v1102 = vmax.f32 %v847, %v982
    %v1103 = vmax.f32 %v852, %v987
    %v1104 = vmax.f32 %v857, %v992
    %v1105 = vmax.f32 %v862, %v997
    %v1106 = vmax.f32 %v867, %v1002
    %v1107 = vmax.f32 %v872, %v1007
    %v1108 = vmax.f32 %v877, %v1012
    %v1109 = vmax.f32 %v882, %v1017
    %v1110 = vmax.f32 %v887, %v1022
    %v1111 = vmax.f32 %v892, %v1027
    %v1112 = vmax.f32 %v897, %v1032
    %v1113 = vmax.f32 %v902, %v1037
    %v1114 = vmax.f32 %v907, %v1042
    %v1115 = vmax.f32 %v912, %v1047
    %v1116 = vmax.f32 %v917, %v1052
    %v1117 = vmax.f32 %v922, %v1057
    %v1118 = vmax.f32 %v927, %v1062
    %v1119 = vmax.f32 %v1065, %v1092
    %v1120 = vmax.f32 %v1066, %v1093
    %v1121 = vmax.f32 %v1067, %v1094
    %v1122 = vmax.f32 %v1068, %v1095
    %v1123 = vmax.f32 %v1069, %v1096
    %v1124 = vmax.f32 %v1070, %v1097
    %v1125 = vmax.f32 %v1071, %v1098
    %v1126 = vmax.f32 %v1072, %v1099
    %v1127 = vmax.f32 %v1073, %v1100
    %v1128 = vmax.f32 %v1074, %v1101
    %v1129 = vmax.f32 %v1075, %v1102
    %v1130 = vmax.f32 %v1076, %v1103
    %v1131 = vmax.f32 %v1077, %v1104
    %v1132 = vmax.f32 %v1078, %v1105
    %v1133 = vmax.f32 %v1079, %v1106
    %v1134 = vmax.f32 %v1080, %v1107
    %v1135 = vmax.f32 %v1081, %v1108
    %v1136 = vmax.f32 %v1082, %v1109
    %v1137 = vmax.f32 %v1083, %v1110
    %v1138 = vmax.f32 %v1084, %v1111
    %v1139 = vmax.f32 %v1085, %v1112
    %v1140 = vmax.f32 %v1086, %v1113
    %v1141 = vmax.f32 %v1087, %v1114
    %v1142 = vmax.f32 %v1088, %v1115
    %v1143 = vmax.f32 %v1089, %v1116
    %v1144 = vmax.f32 %v1090, %v1117
    %v1145 = vmax.f32 %v1091, %v1118
    %v1146 = vld [vmem:[%s2 + $0x38] sm:$0x1]
    %v1147 = vlaneseq
    %v1148 = vshrl.u32 %v1147, 7
    %v1149 = vsub.s32 0, %v1148
    %v1150 = vrot.slane %v1146, %v1149
    %v1151 = vadd.f32 %v1119, %v1150
    %v1152 = vadd.f32 %v1120, %v1150
    %v1153 = vadd.f32 %v1121, %v1150
    %v1154 = vadd.f32 %v1122, %v1150
    %v1155 = vadd.f32 %v1123, %v1150
    %v1156 = vadd.f32 %v1124, %v1150
    %v1157 = vadd.f32 %v1125, %v1150
    %v1158 = vadd.f32 %v1126, %v1150
    %v1159 = vadd.f32 %v1127, %v1150
    %v1160 = vadd.f32 %v1128, %v1150
    %v1161 = vadd.f32 %v1129, %v1150
    %v1162 = vadd.f32 %v1130, %v1150
    %v1163 = vadd.f32 %v1131, %v1150
    %v1164 = vadd.f32 %v1132, %v1150
    %v1165 = vadd.f32 %v1133, %v1150
    %v1166 = vadd.f32 %v1134, %v1150
    %v1167 = vadd.f32 %v1135, %v1150
    %v1168 = vadd.f32 %v1136, %v1150
    %v1169 = vadd.f32 %v1137, %v1150
    %v1170 = vadd.f32 %v1138, %v1150
    %v1171 = vadd.f32 %v1139, %v1150
    %v1172 = vadd.f32 %v1140, %v1150
    %v1173 = vadd.f32 %v1141, %v1150
    %v1174 = vadd.f32 %v1142, %v1150
    %v1175 = vadd.f32 %v1143, %v1150
    %v1176 = vadd.f32 %v1144, %v1150
    %v1177 = vadd.f32 %v1145, %v1150
    %vm1178 = vcmask 64512
    %1179 = vst.msk [vmem:[#allocation2] sm:$0xff] %vm1178, %v1151
    %1180 = vst.msk [vmem:[#allocation2 + $0x8] sm:$0xff] %vm1178, %v1152
    %1181 = vst.msk [vmem:[#allocation2 + $0x10] sm:$0xff] %vm1178, %v1153
    %1182 = vst.msk [vmem:[#allocation2 + $0x18] sm:$0xff] %vm1178, %v1154
    %1183 = vst.msk [vmem:[#allocation2 + $0x20] sm:$0xff] %vm1178, %v1155
    %1184 = vst.msk [vmem:[#allocation2 + $0x28] sm:$0xff] %vm1178, %v1156
    %1185 = vst.msk [vmem:[#allocation2 + $0x30] sm:$0xff] %vm1178, %v1157
    %1186 = vst.msk [vmem:[#allocation2 + $0x38] sm:$0xff] %vm1178, %v1158
    %1187 = vst.msk [vmem:[#allocation2 + $0x40] sm:$0xff] %vm1178, %v1159
    %1188 = vst.msk [vmem:[#allocation2 + $0x48] sm:$0xff] %vm1178, %v1160
    %1189 = vst.msk [vmem:[#allocation2 + $0x50] sm:$0xff] %vm1178, %v1161
    %1190 = vst.msk [vmem:[#allocation2 + $0x58] sm:$0xff] %vm1178, %v1162
    %1191 = vst.msk [vmem:[#allocation2 + $0x60] sm:$0xff] %vm1178, %v1163
    %1192 = vst.msk [vmem:[#allocation2 + $0x68] sm:$0xff] %vm1178, %v1164
    %1193 = vst.msk [vmem:[#allocation2 + $0x70] sm:$0xff] %vm1178, %v1165
    %1194 = vst.msk [vmem:[#allocation2 + $0x78] sm:$0xff] %vm1178, %v1166
    %1195 = vst.msk [vmem:[#allocation2 + $0x80] sm:$0xff] %vm1178, %v1167
    %1196 = vst.msk [vmem:[#allocation2 + $0x88] sm:$0xff] %vm1178, %v1168
    %1197 = vst.msk [vmem:[#allocation2 + $0x90] sm:$0xff] %vm1178, %v1169
    %1198 = vst.msk [vmem:[#allocation2 + $0x98] sm:$0xff] %vm1178, %v1170
    %1199 = vst.msk [vmem:[#allocation2 + $0xa0] sm:$0xff] %vm1178, %v1171
    %1200 = vst.msk [vmem:[#allocation2 + $0xa8] sm:$0xff] %vm1178, %v1172
    %1201 = vst.msk [vmem:[#allocation2 + $0xb0] sm:$0xff] %vm1178, %v1173
    %1202 = vst.msk [vmem:[#allocation2 + $0xb8] sm:$0xff] %vm1178, %v1174
    %1203 = vst.msk [vmem:[#allocation2 + $0xc0] sm:$0xff] %vm1178, %v1175
    %1204 = vst.msk [vmem:[#allocation2 + $0xc8] sm:$0xff] %vm1178, %v1176
    %1205 = vst.msk [vmem:[#allocation2 + $0xd0] sm:$0xff] %vm1178, %v1177
    %v1206 = vld [vmem:[#allocation2] sm:$0xff]
    %v1207 = vld [vmem:[#allocation2 + $0x8] sm:$0xff]
    %v1208 = vld [vmem:[#allocation2 + $0x10] sm:$0xff]
    %v1209 = vld [vmem:[#allocation2 + $0x18] sm:$0xff]
    %v1210 = vld [vmem:[#allocation2 + $0x20] sm:$0xff]
    %v1211 = vld [vmem:[#allocation2 + $0x28] sm:$0xff]
    %v1212 = vld [vmem:[#allocation2 + $0x30] sm:$0xff]
    %v1213 = vld [vmem:[#allocation2 + $0x38] sm:$0xff]
    %v1214 = vld [vmem:[#allocation2 + $0x40] sm:$0xff]
    %vm1215 = vcmp.gt.f32.partialorder 0.0, 1.0
    %v1216 = vsel %vm1215, 1, 0
    %v1217 = vcvt.s32.f32 %v1216
    %v1218 = vadd.f32 %v1206, 0.0
    %v1219 = vadd.f32 %v1207, 0.0
    %v1220 = vadd.f32 %v1208, 0.0
    %v1221 = vadd.f32 %v1209, 0.0
    %v1222 = vadd.f32 %v1210, 0.0
    %v1223 = vadd.f32 %v1211, 0.0
    %v1224 = vadd.f32 %v1212, 0.0
    %v1225 = vadd.f32 %v1213, 0.0
    %v1226 = vadd.f32 %v1214, 0.0
    %v1227 = vadd.f32 %v1218, 0.0
    %v1228 = vadd.f32 %v1219, 0.0
    %v1229 = vadd.f32 %v1220, 0.0
    %v1230 = vadd.f32 %v1221, 0.0
    %v1231 = vadd.f32 %v1222, 0.0
    %v1232 = vadd.f32 %v1223, 0.0
    %v1233 = vadd.f32 %v1224, 0.0
    %v1234 = vadd.f32 %v1225, 0.0
    %v1235 = vadd.f32 %v1226, 0.0
    %v1236 = vsub.f32 %v1227, %v1217
    %v1237 = vsub.f32 %v1228, %v1217
    %v1238 = vsub.f32 %v1229, %v1217
    %v1239 = vsub.f32 %v1230, %v1217
    %v1240 = vsub.f32 %v1231, %v1217
    %v1241 = vsub.f32 %v1232, %v1217
    %v1242 = vsub.f32 %v1233, %v1217
    %v1243 = vsub.f32 %v1234, %v1217
    %v1244 = vsub.f32 %v1235, %v1217
    %vm1245 = vcmp.gt.f32.partialorder %v1236, 1.0
    %vm1246 = vcmp.gt.f32.partialorder %v1237, 1.0
    %vm1247 = vcmp.gt.f32.partialorder %v1238, 1.0
    %vm1248 = vcmp.gt.f32.partialorder %v1239, 1.0
    %vm1249 = vcmp.gt.f32.partialorder %v1240, 1.0
    %vm1250 = vcmp.gt.f32.partialorder %v1241, 1.0
    %vm1251 = vcmp.gt.f32.partialorder %v1242, 1.0
    %vm1252 = vcmp.gt.f32.partialorder %v1243, 1.0
    %vm1253 = vcmp.gt.f32.partialorder %v1244, 1.0
    %v1254 = vsel %vm1245, 1, 0
    %v1255 = vsel %vm1246, 1, 0
    %v1256 = vsel %vm1247, 1, 0
    %v1257 = vsel %vm1248, 1, 0
    %v1258 = vsel %vm1249, 1, 0
    %v1259 = vsel %vm1250, 1, 0
    %v1260 = vsel %vm1251, 1, 0
    %v1261 = vsel %vm1252, 1, 0
    %v1262 = vsel %vm1253, 1, 0
    %v1263 = vcvt.s32.f32 %v1254
    %v1264 = vcvt.s32.f32 %v1255
    %v1265 = vcvt.s32.f32 %v1256
    %v1266 = vcvt.s32.f32 %v1257
    %v1267 = vcvt.s32.f32 %v1258
    %v1268 = vcvt.s32.f32 %v1259
    %v1269 = vcvt.s32.f32 %v1260
    %v1270 = vcvt.s32.f32 %v1261
    %v1271 = vcvt.s32.f32 %v1262
    %v1272 = vpack.c.bf16 %v1264, %v1263
    %v1273 = vpack.c.bf16 %v1266, %v1265
    %v1274 = vpack.c.bf16 %v1268, %v1267
    %v1275 = vpack.c.bf16 %v1270, %v1269
    %v1276 = vpack.c.bf16 %v1271, %v1271
    %v1277 = vld [vmem:[%s1] sm:$0xf]
    %v1278 = vld [vmem:[%s1 + $0x4] sm:$0xf]
    %v1279 = vld [vmem:[%s1 + $0x8] sm:$0xf]
    %v1280 = vld [vmem:[%s1 + $0xc] sm:$0xf]
    %v1281 = vld [vmem:[%s1 + $0x10] sm:$0xf]
    %v1282 = vld [vmem:[%s1 + $0x14] sm:$0xf]
    %v1283 = vld [vmem:[%s1 + $0x18] sm:$0xf]
    %v1284 = vld [vmem:[%s1 + $0x1c] sm:$0xf]
    %v1285 = vld [vmem:[%s1 + $0x20] sm:$0xf]
    %v1286 = vld [vmem:[%s1 + $0x24] sm:$0xf]
    %v1287 = vld [vmem:[%s1 + $0x28] sm:$0xf]
    %v1288 = vld [vmem:[%s1 + $0x2c] sm:$0xf]
    %v1289 = vld [vmem:[%s1 + $0x30] sm:$0xf]
    %v1290 = vld [vmem:[%s1 + $0x34] sm:$0xf]
    %v1291 = vld [vmem:[%s1 + $0x38] sm:$0xf]
    %v1292 = vld [vmem:[%s1 + $0x3c] sm:$0xf]
    %v1293 = vld [vmem:[%s1 + $0x40] sm:$0xf]
    %v1294 = vld [vmem:[%s1 + $0x44] sm:$0xf]
    %v1295 = vld [vmem:[%s1 + $0x48] sm:$0xf]
    %v1296 = vld [vmem:[%s1 + $0x4c] sm:$0xf]
    %v1297 = vld [vmem:[%s1 + $0x50] sm:$0xf]
    %v1298 = vld [vmem:[%s1 + $0x54] sm:$0xf]
    %v1299 = vld [vmem:[%s1 + $0x58] sm:$0xf]
    %v1300 = vld [vmem:[%s1 + $0x5c] sm:$0xf]
    %v1301 = vld [vmem:[%s1 + $0x60] sm:$0xf]
    %v1327 = vunpack.c.l.b16 %v1277
    %v1328 = vunpack.c.l.b16 %v1278
    %v1329 = vunpack.c.l.b16 %v1279
    %v1330 = vunpack.c.l.b16 %v1280
    %v1331 = vunpack.c.l.b16 %v1281
    %v1332 = vunpack.c.l.b16 %v1282
    %v1333 = vunpack.c.l.b16 %v1283
    %v1334 = vunpack.c.l.b16 %v1284
    %v1335 = vunpack.c.l.b16 %v1285
    %v1336 = vunpack.c.l.b16 %v1286
    %v1337 = vunpack.c.l.b16 %v1287
    %v1338 = vunpack.c.l.b16 %v1288
    %v1339 = vunpack.c.l.b16 %v1289
    %v1340 = vunpack.c.l.b16 %v1290
    %v1341 = vunpack.c.l.b16 %v1291
    %v1342 = vunpack.c.l.b16 %v1292
    %v1343 = vunpack.c.l.b16 %v1293
    %v1344 = vunpack.c.l.b16 %v1294
    %v1345 = vunpack.c.l.b16 %v1295
    %v1346 = vunpack.c.l.b16 %v1296
    %v1347 = vunpack.c.l.b16 %v1297
    %v1348 = vunpack.c.l.b16 %v1298
    %v1349 = vunpack.c.l.b16 %v1299
    %v1350 = vunpack.c.l.b16 %v1300
    %v1351 = vunpack.c.l.b16 %v1301
    %v1352 = vpack.c.b16 %v1328, %v1327
    %v1353 = vpack.c.b16 %v1330, %v1329
    %v1354 = vpack.c.b16 %v1332, %v1331
    %v1355 = vpack.c.b16 %v1334, %v1333
    %v1356 = vpack.c.b16 %v1336, %v1335
    %v1357 = vpack.c.b16 %v1338, %v1337
    %v1358 = vpack.c.b16 %v1340, %v1339
    %v1359 = vpack.c.b16 %v1342, %v1341
    %v1360 = vpack.c.b16 %v1344, %v1343
    %v1361 = vpack.c.b16 %v1346, %v1345
    %v1362 = vpack.c.b16 %v1348, %v1347
    %v1363 = vpack.c.b16 %v1350, %v1349
    %v1364 = vpack.c.b16 %v1351, %v1351
    %vm1365 = vcmask 588800
    %v1367 = vsel %vm1365, %v1352, 0
    %v1370 = vsel %vm1365, %v1353, 0
    %v1373 = vsel %vm1365, %v1354, 0
    %v1376 = vsel %vm1365, %v1355, 0
    %v1379 = vsel %vm1365, %v1356, 0
    %v1382 = vsel %vm1365, %v1357, 0
    %v1385 = vsel %vm1365, %v1358, 0
    %v1388 = vsel %vm1365, %v1359, 0
    %v1391 = vsel %vm1365, %v1360, 0
    %v1394 = vsel %vm1365, %v1361, 0
    %v1397 = vsel %vm1365, %v1362, 0
    %v1400 = vsel %vm1365, %v1363, 0
    %v1403 = vsel %vm1365, %v1364, 0
    %vm1405 = vcmask 1043456
    %v1407 = vsel %vm1405, %v1276, 0
    %1409 = vmatprep.subr.bf16.mxu0 0
    %1410 = vmatpush1.bf16.msra.mxu0 0
    %1411 = vmatprep.subr.bf16.mxu0 0
    %1412 = vmatpush1.bf16.msra.mxu0 0
    %1413 = vmatprep.subr.bf16.mxu0 0
    %1414 = vmatpush1.bf16.msra.mxu0 0
    %1415 = vmatprep.subr.bf16.mxu0 0
    %1416 = vmatpush1.bf16.msra.mxu0 %v1407
    %1417 = vmatprep.subr.bf16.mxu0 0
    %1418 = vmatpush1.bf16.msra.mxu0 %v1275
    %1419 = vmatprep.subr.bf16.mxu0 0
    %1420 = vmatpush1.bf16.msra.mxu0 %v1274
    %1421 = vmatprep.subr.bf16.mxu0 0
    %1422 = vmatpush1.bf16.msra.mxu0 %v1273
    %1423 = vmatprep.subr.bf16.mxu0 0
    %1424 = vmatpush1.bf16.msra.mxu0 %v1272
    %1425 = vmatprep.subr.bf16.mxu0 0
    %1426 = vmatpush2.bf16.msra.mxu0 0
    %1427 = vmatprep.subr.bf16.mxu0 0
    %1428 = vmatpush2.bf16.msra.mxu0 0
    %1429 = vmatprep.subr.bf16.mxu0 0
    %1430 = vmatpush2.bf16.msra.mxu0 0
    %1431 = vmatprep.subr.bf16.mxu0 0
    %1432 = vmatpush2.bf16.msra.mxu0 0
    %1433 = vmatprep.subr.bf16.mxu0 0
    %1434 = vmatpush2.bf16.msra.mxu0 0
    %1435 = vmatprep.subr.bf16.mxu0 0
    %1436 = vmatpush2.bf16.msra.mxu0 0
    %1437 = vmatprep.subr.bf16.mxu0 0
    %1438 = vmatpush2.bf16.msra.mxu0 0
    %1439 = vmatprep.subr.bf16.mxu0 0
    %1440 = vmatpush2.bf16.msra.mxu0 0
    %1441 = vmatprep.mubr.bf16.mxu0 0
    %1442 = vmatmul.mubr.bf16.gmra.mxu0 %v1367
    %v1443 = vpop.f32.mrf.mxu0
    %v1444 = vadd.f32 0.0, %v1443
    %v1445 = vpop.f32.mrf.mxu0
    %v1446 = vpop.f32.mrf.mxu0
    %v1447 = vadd.f32 0.0, %v1446
    %v1448 = vpop.f32.mrf.mxu0
    %1449 = vmatprep.mubr.bf16.mxu0 0
    %1450 = vmatmul.mubr.bf16.gmra.mxu0 %v1370
    %v1451 = vpop.f32.mrf.mxu0
    %v1452 = vadd.f32 0.0, %v1451
    %v1453 = vpop.f32.mrf.mxu0
    %v1454 = vpop.f32.mrf.mxu0
    %v1455 = vadd.f32 0.0, %v1454
    %v1456 = vpop.f32.mrf.mxu0
    %1457 = vmatprep.mubr.bf16.mxu0 0
    %1458 = vmatmul.mubr.bf16.gmra.mxu0 %v1373
    %v1459 = vpop.f32.mrf.mxu0
    %v1460 = vadd.f32 0.0, %v1459
    %v1461 = vpop.f32.mrf.mxu0
    %v1462 = vpop.f32.mrf.mxu0
    %v1463 = vadd.f32 0.0, %v1462
    %v1464 = vpop.f32.mrf.mxu0
    %1465 = vmatprep.mubr.bf16.mxu0 0
    %1466 = vmatmul.mubr.bf16.gmra.mxu0 %v1376
    %v1467 = vpop.f32.mrf.mxu0
    %v1468 = vadd.f32 0.0, %v1467
    %v1469 = vpop.f32.mrf.mxu0
    %v1470 = vpop.f32.mrf.mxu0
    %v1471 = vadd.f32 0.0, %v1470
    %v1472 = vpop.f32.mrf.mxu0
    %1473 = vmatprep.mubr.bf16.mxu0 0
    %1474 = vmatmul.mubr.bf16.gmra.mxu0 %v1379
    %v1475 = vpop.f32.mrf.mxu0
    %v1476 = vadd.f32 0.0, %v1475
    %v1477 = vpop.f32.mrf.mxu0
    %v1478 = vpop.f32.mrf.mxu0
    %v1479 = vadd.f32 0.0, %v1478
    %v1480 = vpop.f32.mrf.mxu0
    %1481 = vmatprep.mubr.bf16.mxu0 0
    %1482 = vmatmul.mubr.bf16.gmra.mxu0 %v1382
    %v1483 = vpop.f32.mrf.mxu0
    %v1484 = vadd.f32 0.0, %v1483
    %v1485 = vpop.f32.mrf.mxu0
    %v1486 = vpop.f32.mrf.mxu0
    %v1487 = vadd.f32 0.0, %v1486
    %v1488 = vpop.f32.mrf.mxu0
    %1489 = vmatprep.mubr.bf16.mxu0 0
    %1490 = vmatmul.mubr.bf16.gmra.mxu0 %v1385
    %v1491 = vpop.f32.mrf.mxu0
    %v1492 = vadd.f32 0.0, %v1491
    %v1493 = vpop.f32.mrf.mxu0
    %v1494 = vpop.f32.mrf.mxu0
    %v1495 = vadd.f32 0.0, %v1494
    %v1496 = vpop.f32.mrf.mxu0
    %1497 = vmatprep.mubr.bf16.mxu0 0
    %1498 = vmatmul.mubr.bf16.gmra.mxu0 %v1388
    %v1499 = vpop.f32.mrf.mxu0
    %v1500 = vadd.f32 0.0, %v1499
    %v1501 = vpop.f32.mrf.mxu0
    %v1502 = vpop.f32.mrf.mxu0
    %v1503 = vadd.f32 0.0, %v1502
    %v1504 = vpop.f32.mrf.mxu0
    %1505 = vmatprep.mubr.bf16.mxu0 0
    %1506 = vmatmul.mubr.bf16.gmra.mxu0 %v1391
    %v1507 = vpop.f32.mrf.mxu0
    %v1508 = vadd.f32 0.0, %v1507
    %v1509 = vpop.f32.mrf.mxu0
    %v1510 = vpop.f32.mrf.mxu0
    %v1511 = vadd.f32 0.0, %v1510
    %v1512 = vpop.f32.mrf.mxu0
    %1513 = vmatprep.mubr.bf16.mxu0 0
    %1514 = vmatmul.mubr.bf16.gmra.mxu0 %v1394
    %v1515 = vpop.f32.mrf.mxu0
    %v1516 = vadd.f32 0.0, %v1515
    %v1517 = vpop.f32.mrf.mxu0
    %v1518 = vpop.f32.mrf.mxu0
    %v1519 = vadd.f32 0.0, %v1518
    %v1520 = vpop.f32.mrf.mxu0
    %1521 = vmatprep.mubr.bf16.mxu0 0
    %1522 = vmatmul.mubr.bf16.gmra.mxu0 %v1397
    %v1523 = vpop.f32.mrf.mxu0
    %v1524 = vadd.f32 0.0, %v1523
    %v1525 = vpop.f32.mrf.mxu0
    %v1526 = vpop.f32.mrf.mxu0
    %v1527 = vadd.f32 0.0, %v1526
    %v1528 = vpop.f32.mrf.mxu0
    %1529 = vmatprep.mubr.bf16.mxu0 0
    %1530 = vmatmul.mubr.bf16.gmra.mxu0 %v1400
    %v1531 = vpop.f32.mrf.mxu0
    %v1532 = vadd.f32 0.0, %v1531
    %v1533 = vpop.f32.mrf.mxu0
    %v1534 = vpop.f32.mrf.mxu0
    %v1535 = vadd.f32 0.0, %v1534
    %v1536 = vpop.f32.mrf.mxu0
    %1537 = vmatprep.mubr.bf16.mxu0 0
    %1538 = vmatmul.mubr.bf16.gmra.mxu0 %v1403
    %v1539 = vpop.f32.mrf.mxu0
    %v1540 = vadd.f32 0.0, %v1539
    %v1541 = vpop.f32.mrf.mxu0
    %v1542 = vpop.f32.mrf.mxu0
    %v1543 = vpop.f32.mrf.mxu0
    %1544 = vdwg.mxu0
    %1546 = vrot.lane.b32.xlu0 %v1447, 8
    %v1547 = vpop.permute.xlu0 %1546
    %1550 = vrot.lane.b32.xlu0 %v1452, 16
    %v1551 = vpop.permute.xlu0 %1550
    %1554 = vrot.lane.b32.xlu0 %v1455, 24
    %v1555 = vpop.permute.xlu0 %1554
    %1558 = vrot.lane.b32.xlu0 %v1460, 32
    %v1559 = vpop.permute.xlu0 %1558
    %1562 = vrot.lane.b32.xlu0 %v1463, 40
    %v1563 = vpop.permute.xlu0 %1562
    %1566 = vrot.lane.b32.xlu0 %v1468, 48
    %v1567 = vpop.permute.xlu0 %1566
    %1570 = vrot.lane.b32.xlu0 %v1471, 56
    %v1571 = vpop.permute.xlu0 %1570
    %1574 = vrot.lane.b32.xlu0 %v1476, 64
    %v1575 = vpop.permute.xlu0 %1574
    %1578 = vrot.lane.b32.xlu0 %v1479, 72
    %v1579 = vpop.permute.xlu0 %1578
    %1582 = vrot.lane.b32.xlu0 %v1484, 80
    %v1583 = vpop.permute.xlu0 %1582
    %1586 = vrot.lane.b32.xlu0 %v1487, 88
    %v1587 = vpop.permute.xlu0 %1586
    %1590 = vrot.lane.b32.xlu0 %v1492, 96
    %v1591 = vpop.permute.xlu0 %1590
    %1594 = vrot.lane.b32.xlu0 %v1495, 104
    %v1595 = vpop.permute.xlu0 %1594
    %1598 = vrot.lane.b32.xlu0 %v1500, 112
    %v1599 = vpop.permute.xlu0 %1598
    %1602 = vrot.lane.b32.xlu0 %v1503, 120
    %v1603 = vpop.permute.xlu0 %1602
    %v1605 = vsel %vm1178, %v1444, %v1547
    %vm1606 = vcmask 130048
    %v1607 = vsel %vm1606, %v1605, %v1551
    %vm1608 = vcmask 195584
    %v1609 = vsel %vm1608, %v1607, %v1555
    %vm1610 = vcmask 261120
    %v1611 = vsel %vm1610, %v1609, %v1559
    %vm1612 = vcmask 326656
    %v1613 = vsel %vm1612, %v1611, %v1563
    %vm1614 = vcmask 392192
    %v1615 = vsel %vm1614, %v1613, %v1567
    %vm1616 = vcmask 457728
    %v1617 = vsel %vm1616, %v1615, %v1571
    %vm1618 = vcmask 523264
    %v1619 = vsel %vm1618, %v1617, %v1575
    %v1620 = vsel %vm1365, %v1619, %v1579
    %vm1621 = vcmask 654336
    %v1622 = vsel %vm1621, %v1620, %v1583
    %vm1623 = vcmask 719872
    %v1624 = vsel %vm1623, %v1622, %v1587
    %vm1625 = vcmask 785408
    %v1626 = vsel %vm1625, %v1624, %v1591
    %vm1627 = vcmask 850944
    %v1628 = vsel %vm1627, %v1626, %v1595
    %vm1629 = vcmask 916480
    %v1630 = vsel %vm1629, %v1628, %v1599
    %vm1631 = vcmask 982016
    %v1632 = vsel %vm1631, %v1630, %v1603
    %1634 = vrot.lane.b32.xlu0 %v1511, 8
    %v1635 = vpop.permute.xlu0 %1634
    %1638 = vrot.lane.b32.xlu0 %v1516, 16
    %v1639 = vpop.permute.xlu0 %1638
    %1642 = vrot.lane.b32.xlu0 %v1519, 24
    %v1643 = vpop.permute.xlu0 %1642
    %1646 = vrot.lane.b32.xlu0 %v1524, 32
    %v1647 = vpop.permute.xlu0 %1646
    %1650 = vrot.lane.b32.xlu0 %v1527, 40
    %v1651 = vpop.permute.xlu0 %1650
    %1654 = vrot.lane.b32.xlu0 %v1532, 48
    %v1655 = vpop.permute.xlu0 %1654
    %1658 = vrot.lane.b32.xlu0 %v1535, 56
    %v1659 = vpop.permute.xlu0 %1658
    %1662 = vrot.lane.b32.xlu0 %v1540, 64
    %v1663 = vpop.permute.xlu0 %1662
    %v1665 = vsel %vm1178, %v1508, %v1635
    %v1666 = vsel %vm1606, %v1665, %v1639
    %v1667 = vsel %vm1608, %v1666, %v1643
    %v1668 = vsel %vm1610, %v1667, %v1647
    %v1669 = vsel %vm1612, %v1668, %v1651
    %v1670 = vsel %vm1614, %v1669, %v1655
    %v1671 = vsel %vm1616, %v1670, %v1659
    %v1672 = vsel %vm1618, %v1671, %v1663
    %v1673 = vld [vmem:[%s2 + $0x40] sm:$0xff]
    %v1674 = vld [vmem:[%s2 + $0x48] sm:$0xff]
    %v1675 = vld [vmem:[%s2 + $0x50] sm:$0xff]
    %v1676 = vld [vmem:[%s2 + $0x58] sm:$0xff]
    %v1677 = vld [vmem:[%s2 + $0x60] sm:$0xff]
    %v1678 = vld [vmem:[%s2 + $0x68] sm:$0xff]
    %v1679 = vld [vmem:[%s2 + $0x70] sm:$0xff]
    %v1680 = vld [vmem:[%s2 + $0x78] sm:$0xff]
    %v1681 = vld [vmem:[%s2 + $0x80] sm:$0xff]
    %v1682 = vld [vmem:[%s2 + $0x88] sm:$0xff]
    %v1683 = vld [vmem:[%s2 + $0x90] sm:$0xff]
    %v1684 = vld [vmem:[%s2 + $0x98] sm:$0xff]
    %v1685 = vld [vmem:[%s2 + $0xa0] sm:$0xff]
    %v1686 = vld [vmem:[%s2 + $0xa8] sm:$0xff]
    %v1687 = vld [vmem:[%s2 + $0xb0] sm:$0xff]
    %v1688 = vld [vmem:[%s2 + $0xb8] sm:$0xff]
    %v1689 = vld [vmem:[%s2 + $0xc0] sm:$0xff]
    %v1690 = vld [vmem:[%s2 + $0xc8] sm:$0xff]
    %v1691 = vld [vmem:[%s2 + $0xd0] sm:$0xff]
    %v1692 = vld [vmem:[%s2 + $0xd8] sm:$0xff]
    %v1693 = vld [vmem:[%s2 + $0xe0] sm:$0xff]
    %v1694 = vld [vmem:[%s2 + $0xe8] sm:$0xff]
    %v1695 = vld [vmem:[%s2 + $0xf0] sm:$0xff]
    %v1696 = vld [vmem:[%s2 + $0xf8] sm:$0xff]
    %v1697 = vld [vmem:[%s2 + $0x100] sm:$0xff]
    %v1698 = vld [vmem:[%s2 + $0x108] sm:$0x1]
    %v1699 = vlaneseq
    %v1700 = vshrl.u32 %v1699, 7
    %v1701 = vsub.s32 0, %v1700
    %v1702 = vrot.slane %v1698, %v1701
    %v1704 = vsel %vm1365, %v1672, 0
    %1706 = vmatprep.subr.mxu0 0.0
    %1707 = vmatpush1.msra.mxu0 %v1688
    %1708 = vmatprep.subr.mxu0 0.0
    %1709 = vmatpush1.msra.mxu0 %v1687
    %1710 = vmatprep.subr.mxu0 0.0
    %1711 = vmatpush1.msra.mxu0 %v1686
    %1712 = vmatprep.subr.mxu0 0.0
    %1713 = vmatpush1.msra.mxu0 %v1685
    %1714 = vmatprep.subr.mxu0 0.0
    %1715 = vmatpush1.msra.mxu0 %v1684
    %1716 = vmatprep.subr.mxu0 0.0
    %1717 = vmatpush1.msra.mxu0 %v1683
    %1718 = vmatprep.subr.mxu0 0.0
    %1719 = vmatpush1.msra.mxu0 %v1682
    %1720 = vmatprep.subr.mxu0 0.0
    %1721 = vmatpush1.msra.mxu0 %v1681
    %1722 = vmatprep.subr.mxu0 0.0
    %1723 = vmatpush1.msra.mxu0 %v1680
    %1724 = vmatprep.subr.mxu0 0.0
    %1725 = vmatpush1.msra.mxu0 %v1679
    %1726 = vmatprep.subr.mxu0 0.0
    %1727 = vmatpush1.msra.mxu0 %v1678
    %1728 = vmatprep.subr.mxu0 0.0
    %1729 = vmatpush1.msra.mxu0 %v1677
    %1730 = vmatprep.subr.mxu0 0.0
    %1731 = vmatpush1.msra.mxu0 %v1676
    %1732 = vmatprep.subr.mxu0 0.0
    %1733 = vmatpush1.msra.mxu0 %v1675
    %1734 = vmatprep.subr.mxu0 0.0
    %1735 = vmatpush1.msra.mxu0 %v1674
    %1736 = vmatprep.subr.mxu0 0.0
    %1737 = vmatpush1.msra.mxu0 %v1673
    %1738 = vmatprep.subr.mxu0 0.0
    %1739 = vmatpush2.msra.mxu0 0.0
    %1740 = vmatprep.subr.mxu0 0.0
    %1741 = vmatpush2.msra.mxu0 0.0
    %1742 = vmatprep.subr.mxu0 0.0
    %1743 = vmatpush2.msra.mxu0 0.0
    %1744 = vmatprep.subr.mxu0 0.0
    %1745 = vmatpush2.msra.mxu0 0.0
    %1746 = vmatprep.subr.mxu0 0.0
    %1747 = vmatpush2.msra.mxu0 0.0
    %1748 = vmatprep.subr.mxu0 0.0
    %1749 = vmatpush2.msra.mxu0 0.0
    %1750 = vmatprep.subr.mxu0 0.0
    %1751 = vmatpush2.msra.mxu0 0.0
    %1752 = vmatprep.subr.mxu0 0.0
    %1753 = vmatpush2.msra.mxu0 %v1697
    %1754 = vmatprep.subr.mxu0 0.0
    %1755 = vmatpush2.msra.mxu0 %v1696
    %1756 = vmatprep.subr.mxu0 0.0
    %1757 = vmatpush2.msra.mxu0 %v1695
    %1758 = vmatprep.subr.mxu0 0.0
    %1759 = vmatpush2.msra.mxu0 %v1694
    %1760 = vmatprep.subr.mxu0 0.0
    %1761 = vmatpush2.msra.mxu0 %v1693
    %1762 = vmatprep.subr.mxu0 0.0
    %1763 = vmatpush2.msra.mxu0 %v1692
    %1764 = vmatprep.subr.mxu0 0.0
    %1765 = vmatpush2.msra.mxu0 %v1691
    %1766 = vmatprep.subr.mxu0 0.0
    %1767 = vmatpush2.msra.mxu0 %v1690
    %1768 = vmatprep.subr.mxu0 0.0
    %1769 = vmatpush2.msra.mxu0 %v1689
    %1770 = vmatprep.mubr.f32.mxu0 %v1704
    %1771 = vmatmul.mubr.f32.gmra.mxu0 %v1632
    %v1772 = vpop.f32.mrf.mxu0
    %v1773 = vadd.f32 %v1702, %v1772
    %v1774 = vpop.f32.mrf.mxu0
    %1775 = vdwg.mxu0
    %v1777 = vrot.slane %v1773, 2
    %v1779 = vmax.f32 %v1773, %v1777
    %v1781 = vrot.slane %v1779, 4
    %v1783 = vmax.f32 %v1779, %v1781
    %v1784 = vadd.f32 %v1783, 0.0
    %v1785 = vadd.f32 %v1784, 0.0
    %v1786 = vsub.f32 %v1785, %v1217
    %v1787 = vld [vmem:[#allocation2 + $0x48] sm:$0xff]
    %v1788 = vld [vmem:[#allocation2 + $0x50] sm:$0xff]
    %v1789 = vld [vmem:[#allocation2 + $0x58] sm:$0xff]
    %v1790 = vld [vmem:[#allocation2 + $0x60] sm:$0xff]
    %v1791 = vld [vmem:[#allocation2 + $0x68] sm:$0xff]
    %v1792 = vld [vmem:[#allocation2 + $0x70] sm:$0xff]
    %v1793 = vld [vmem:[#allocation2 + $0x78] sm:$0xff]
    %v1794 = vld [vmem:[#allocation2 + $0x80] sm:$0xff]
    %v1795 = vld [vmem:[#allocation2 + $0x88] sm:$0xff]
    %v1796 = vmul.f32 %v1218, 0.9
    %v1797 = vmul.f32 %v1219, 0.9
    %v1798 = vmul.f32 %v1220, 0.9
    %v1799 = vmul.f32 %v1221, 0.9
    %v1800 = vmul.f32 %v1222, 0.9
    %v1801 = vmul.f32 %v1223, 0.9
    %v1802 = vmul.f32 %v1224, 0.9
    %v1803 = vmul.f32 %v1225, 0.9
    %v1804 = vmul.f32 %v1226, 0.9
    %v1805 = vadd.f32 %v1796, %v1787
    %v1806 = vadd.f32 %v1797, %v1788
    %v1807 = vadd.f32 %v1798, %v1789
    %v1808 = vadd.f32 %v1799, %v1790
    %v1809 = vadd.f32 %v1800, %v1791
    %v1810 = vadd.f32 %v1801, %v1792
    %v1811 = vadd.f32 %v1802, %v1793
    %v1812 = vadd.f32 %v1803, %v1794
    %v1813 = vadd.f32 %v1804, %v1795
    %v1814 = vmul.f32 %v1236, 0.8
    %v1815 = vmul.f32 %v1237, 0.8
    %v1816 = vmul.f32 %v1238, 0.8
    %v1817 = vmul.f32 %v1239, 0.8
    %v1818 = vmul.f32 %v1240, 0.8
    %v1819 = vmul.f32 %v1241, 0.8
    %v1820 = vmul.f32 %v1242, 0.8
    %v1821 = vmul.f32 %v1243, 0.8
    %v1822 = vmul.f32 %v1244, 0.8
    %v1823 = vadd.f32 %v1814, %v1805
    %v1824 = vadd.f32 %v1815, %v1806
    %v1825 = vadd.f32 %v1816, %v1807
    %v1826 = vadd.f32 %v1817, %v1808
    %v1827 = vadd.f32 %v1818, %v1809
    %v1828 = vadd.f32 %v1819, %v1810
    %v1829 = vadd.f32 %v1820, %v1811
    %v1830 = vadd.f32 %v1821, %v1812
    %v1831 = vadd.f32 %v1822, %v1813
    %v1832 = vsub.f32 %v1823, %v1263
    %v1833 = vsub.f32 %v1824, %v1264
    %v1834 = vsub.f32 %v1825, %v1265
    %v1835 = vsub.f32 %v1826, %v1266
    %v1836 = vsub.f32 %v1827, %v1267
    %v1837 = vsub.f32 %v1828, %v1268
    %v1838 = vsub.f32 %v1829, %v1269
    %v1839 = vsub.f32 %v1830, %v1270
    %v1840 = vsub.f32 %v1831, %v1271
    %vm1841 = vcmp.gt.f32.partialorder %v1832, 1.0
    %vm1842 = vcmp.gt.f32.partialorder %v1833, 1.0
    %vm1843 = vcmp.gt.f32.partialorder %v1834, 1.0
    %vm1844 = vcmp.gt.f32.partialorder %v1835, 1.0
    %vm1845 = vcmp.gt.f32.partialorder %v1836, 1.0
    %vm1846 = vcmp.gt.f32.partialorder %v1837, 1.0
    %vm1847 = vcmp.gt.f32.partialorder %v1838, 1.0
    %vm1848 = vcmp.gt.f32.partialorder %v1839, 1.0
    %vm1849 = vcmp.gt.f32.partialorder %v1840, 1.0
    %v1850 = vsel %vm1841, 1, 0
    %v1851 = vsel %vm1842, 1, 0
    %v1852 = vsel %vm1843, 1, 0
    %v1853 = vsel %vm1844, 1, 0
    %v1854 = vsel %vm1845, 1, 0
    %v1855 = vsel %vm1846, 1, 0
    %v1856 = vsel %vm1847, 1, 0
    %v1857 = vsel %vm1848, 1, 0
    %v1858 = vsel %vm1849, 1, 0
    %v1859 = vcvt.s32.f32 %v1850
    %v1860 = vcvt.s32.f32 %v1851
    %v1861 = vcvt.s32.f32 %v1852
    %v1862 = vcvt.s32.f32 %v1853
    %v1863 = vcvt.s32.f32 %v1854
    %v1864 = vcvt.s32.f32 %v1855
    %v1865 = vcvt.s32.f32 %v1856
    %v1866 = vcvt.s32.f32 %v1857
    %v1867 = vcvt.s32.f32 %v1858
    %v1868 = vpack.c.bf16 %v1860, %v1859
    %v1869 = vpack.c.bf16 %v1862, %v1861
    %v1870 = vpack.c.bf16 %v1864, %v1863
    %v1871 = vpack.c.bf16 %v1866, %v1865
    %v1872 = vpack.c.bf16 %v1867, %v1867
    %v1874 = vsel %vm1405, %v1872, 0
    %1876 = vmatprep.subr.bf16.mxu0 0
    %1877 = vmatpush1.bf16.msra.mxu0 0
    %1878 = vmatprep.subr.bf16.mxu0 0
    %1879 = vmatpush1.bf16.msra.mxu0 0
    %1880 = vmatprep.subr.bf16.mxu0 0
    %1881 = vmatpush1.bf16.msra.mxu0 0
    %1882 = vmatprep.subr.bf16.mxu0 0
    %1883 = vmatpush1.bf16.msra.mxu0 %v1874
    %1884 = vmatprep.subr.bf16.mxu0 0
    %1885 = vmatpush1.bf16.msra.mxu0 %v1871
    %1886 = vmatprep.subr.bf16.mxu0 0
    %1887 = vmatpush1.bf16.msra.mxu0 %v1870
    %1888 = vmatprep.subr.bf16.mxu0 0
    %1889 = vmatpush1.bf16.msra.mxu0 %v1869
    %1890 = vmatprep.subr.bf16.mxu0 0
    %1891 = vmatpush1.bf16.msra.mxu0 %v1868
    %1892 = vmatprep.subr.bf16.mxu0 0
    %1893 = vmatpush2.bf16.msra.mxu0 0
    %1894 = vmatprep.subr.bf16.mxu0 0
    %1895 = vmatpush2.bf16.msra.mxu0 0
    %1896 = vmatprep.subr.bf16.mxu0 0
    %1897 = vmatpush2.bf16.msra.mxu0 0
    %1898 = vmatprep.subr.bf16.mxu0 0
    %1899 = vmatpush2.bf16.msra.mxu0 0
    %1900 = vmatprep.subr.bf16.mxu0 0
    %1901 = vmatpush2.bf16.msra.mxu0 0
    %1902 = vmatprep.subr.bf16.mxu0 0
    %1903 = vmatpush2.bf16.msra.mxu0 0
    %1904 = vmatprep.subr.bf16.mxu0 0
    %1905 = vmatpush2.bf16.msra.mxu0 0
    %1906 = vmatprep.subr.bf16.mxu0 0
    %1907 = vmatpush2.bf16.msra.mxu0 0
    %1908 = vmatprep.mubr.bf16.mxu0 0
    %1909 = vmatmul.mubr.bf16.gmra.mxu0 %v1367
    %v1910 = vpop.f32.mrf.mxu0
    %v1911 = vadd.f32 0.0, %v1910
    %v1912 = vpop.f32.mrf.mxu0
    %v1913 = vpop.f32.mrf.mxu0
    %v1914 = vadd.f32 0.0, %v1913
    %v1915 = vpop.f32.mrf.mxu0
    %1916 = vmatprep.mubr.bf16.mxu0 0
    %1917 = vmatmul.mubr.bf16.gmra.mxu0 %v1370
    %v1918 = vpop.f32.mrf.mxu0
    %v1919 = vadd.f32 0.0, %v1918
    %v1920 = vpop.f32.mrf.mxu0
    %v1921 = vpop.f32.mrf.mxu0
    %v1922 = vadd.f32 0.0, %v1921
    %v1923 = vpop.f32.mrf.mxu0
    %1924 = vmatprep.mubr.bf16.mxu0 0
    %1925 = vmatmul.mubr.bf16.gmra.mxu0 %v1373
    %v1926 = vpop.f32.mrf.mxu0
    %v1927 = vadd.f32 0.0, %v1926
    %v1928 = vpop.f32.mrf.mxu0
    %v1929 = vpop.f32.mrf.mxu0
    %v1930 = vadd.f32 0.0, %v1929
    %v1931 = vpop.f32.mrf.mxu0
    %1932 = vmatprep.mubr.bf16.mxu0 0
    %1933 = vmatmul.mubr.bf16.gmra.mxu0 %v1376
    %v1934 = vpop.f32.mrf.mxu0
    %v1935 = vadd.f32 0.0, %v1934
    %v1936 = vpop.f32.mrf.mxu0
    %v1937 = vpop.f32.mrf.mxu0
    %v1938 = vadd.f32 0.0, %v1937
    %v1939 = vpop.f32.mrf.mxu0
    %1940 = vmatprep.mubr.bf16.mxu0 0
    %1941 = vmatmul.mubr.bf16.gmra.mxu0 %v1379
    %v1942 = vpop.f32.mrf.mxu0
    %v1943 = vadd.f32 0.0, %v1942
    %v1944 = vpop.f32.mrf.mxu0
    %v1945 = vpop.f32.mrf.mxu0
    %v1946 = vadd.f32 0.0, %v1945
    %v1947 = vpop.f32.mrf.mxu0
    %1948 = vmatprep.mubr.bf16.mxu0 0
    %1949 = vmatmul.mubr.bf16.gmra.mxu0 %v1382
    %v1950 = vpop.f32.mrf.mxu0
    %v1951 = vadd.f32 0.0, %v1950
    %v1952 = vpop.f32.mrf.mxu0
    %v1953 = vpop.f32.mrf.mxu0
    %v1954 = vadd.f32 0.0, %v1953
    %v1955 = vpop.f32.mrf.mxu0
    %1956 = vmatprep.mubr.bf16.mxu0 0
    %1957 = vmatmul.mubr.bf16.gmra.mxu0 %v1385
    %v1958 = vpop.f32.mrf.mxu0
    %v1959 = vadd.f32 0.0, %v1958
    %v1960 = vpop.f32.mrf.mxu0
    %v1961 = vpop.f32.mrf.mxu0
    %v1962 = vadd.f32 0.0, %v1961
    %v1963 = vpop.f32.mrf.mxu0
    %1964 = vmatprep.mubr.bf16.mxu0 0
    %1965 = vmatmul.mubr.bf16.gmra.mxu0 %v1388
    %v1966 = vpop.f32.mrf.mxu0
    %v1967 = vadd.f32 0.0, %v1966
    %v1968 = vpop.f32.mrf.mxu0
    %v1969 = vpop.f32.mrf.mxu0
    %v1970 = vadd.f32 0.0, %v1969
    %v1971 = vpop.f32.mrf.mxu0
    %1972 = vmatprep.mubr.bf16.mxu0 0
    %1973 = vmatmul.mubr.bf16.gmra.mxu0 %v1391
    %v1974 = vpop.f32.mrf.mxu0
    %v1975 = vadd.f32 0.0, %v1974
    %v1976 = vpop.f32.mrf.mxu0
    %v1977 = vpop.f32.mrf.mxu0
    %v1978 = vadd.f32 0.0, %v1977
    %v1979 = vpop.f32.mrf.mxu0
    %1980 = vmatprep.mubr.bf16.mxu0 0
    %1981 = vmatmul.mubr.bf16.gmra.mxu0 %v1394
    %v1982 = vpop.f32.mrf.mxu0
    %v1983 = vadd.f32 0.0, %v1982
    %v1984 = vpop.f32.mrf.mxu0
    %v1985 = vpop.f32.mrf.mxu0
    %v1986 = vadd.f32 0.0, %v1985
    %v1987 = vpop.f32.mrf.mxu0
    %1988 = vmatprep.mubr.bf16.mxu0 0
    %1989 = vmatmul.mubr.bf16.gmra.mxu0 %v1397
    %v1990 = vpop.f32.mrf.mxu0
    %v1991 = vadd.f32 0.0, %v1990
    %v1992 = vpop.f32.mrf.mxu0
    %v1993 = vpop.f32.mrf.mxu0
    %v1994 = vadd.f32 0.0, %v1993
    %v1995 = vpop.f32.mrf.mxu0
    %1996 = vmatprep.mubr.bf16.mxu0 0
    %1997 = vmatmul.mubr.bf16.gmra.mxu0 %v1400
    %v1998 = vpop.f32.mrf.mxu0
    %v1999 = vadd.f32 0.0, %v1998
    %v2000 = vpop.f32.mrf.mxu0
    %v2001 = vpop.f32.mrf.mxu0
    %v2002 = vadd.f32 0.0, %v2001
    %v2003 = vpop.f32.mrf.mxu0
    %2004 = vmatprep.mubr.bf16.mxu0 0
    %2005 = vmatmul.mubr.bf16.gmra.mxu0 %v1403
    %v2006 = vpop.f32.mrf.mxu0
    %v2007 = vadd.f32 0.0, %v2006
    %v2008 = vpop.f32.mrf.mxu0
    %v2009 = vpop.f32.mrf.mxu0
    %v2010 = vpop.f32.mrf.mxu0
    %2011 = vdwg.mxu0
    %2013 = vrot.lane.b32.xlu0 %v1914, 8
    %v2014 = vpop.permute.xlu0 %2013
    %2017 = vrot.lane.b32.xlu0 %v1919, 16
    %v2018 = vpop.permute.xlu0 %2017
    %2021 = vrot.lane.b32.xlu0 %v1922, 24
    %v2022 = vpop.permute.xlu0 %2021
    %2025 = vrot.lane.b32.xlu0 %v1927, 32
    %v2026 = vpop.permute.xlu0 %2025
    %2029 = vrot.lane.b32.xlu0 %v1930, 40
    %v2030 = vpop.permute.xlu0 %2029
    %2033 = vrot.lane.b32.xlu0 %v1935, 48
    %v2034 = vpop.permute.xlu0 %2033
    %2037 = vrot.lane.b32.xlu0 %v1938, 56
    %v2038 = vpop.permute.xlu0 %2037
    %2041 = vrot.lane.b32.xlu0 %v1943, 64
    %v2042 = vpop.permute.xlu0 %2041
    %2045 = vrot.lane.b32.xlu0 %v1946, 72
    %v2046 = vpop.permute.xlu0 %2045
    %2049 = vrot.lane.b32.xlu0 %v1951, 80
    %v2050 = vpop.permute.xlu0 %2049
    %2053 = vrot.lane.b32.xlu0 %v1954, 88
    %v2054 = vpop.permute.xlu0 %2053
    %2057 = vrot.lane.b32.xlu0 %v1959, 96
    %v2058 = vpop.permute.xlu0 %2057
    %2061 = vrot.lane.b32.xlu0 %v1962, 104
    %v2062 = vpop.permute.xlu0 %2061
    %2065 = vrot.lane.b32.xlu0 %v1967, 112
    %v2066 = vpop.permute.xlu0 %2065
    %2069 = vrot.lane.b32.xlu0 %v1970, 120
    %v2070 = vpop.permute.xlu0 %2069
    %v2072 = vsel %vm1178, %v1911, %v2014
    %v2073 = vsel %vm1606, %v2072, %v2018
    %v2074 = vsel %vm1608, %v2073, %v2022
    %v2075 = vsel %vm1610, %v2074, %v2026
    %v2076 = vsel %vm1612, %v2075, %v2030
    %v2077 = vsel %vm1614, %v2076, %v2034
    %v2078 = vsel %vm1616, %v2077, %v2038
    %v2079 = vsel %vm1618, %v2078, %v2042
    %v2080 = vsel %vm1365, %v2079, %v2046
    %v2081 = vsel %vm1621, %v2080, %v2050
    %v2082 = vsel %vm1623, %v2081, %v2054
    %v2083 = vsel %vm1625, %v2082, %v2058
    %v2084 = vsel %vm1627, %v2083, %v2062
    %v2085 = vsel %vm1629, %v2084, %v2066
    %v2086 = vsel %vm1631, %v2085, %v2070
    %2088 = vrot.lane.b32.xlu0 %v1978, 8
    %v2089 = vpop.permute.xlu0 %2088
    %2092 = vrot.lane.b32.xlu0 %v1983, 16
    %v2093 = vpop.permute.xlu0 %2092
    %2096 = vrot.lane.b32.xlu0 %v1986, 24
    %v2097 = vpop.permute.xlu0 %2096
    %2100 = vrot.lane.b32.xlu0 %v1991, 32
    %v2101 = vpop.permute.xlu0 %2100
    %2104 = vrot.lane.b32.xlu0 %v1994, 40
    %v2105 = vpop.permute.xlu0 %2104
    %2108 = vrot.lane.b32.xlu0 %v1999, 48
    %v2109 = vpop.permute.xlu0 %2108
    %2112 = vrot.lane.b32.xlu0 %v2002, 56
    %v2113 = vpop.permute.xlu0 %2112
    %2116 = vrot.lane.b32.xlu0 %v2007, 64
    %v2117 = vpop.permute.xlu0 %2116
    %v2119 = vsel %vm1178, %v1975, %v2089
    %v2120 = vsel %vm1606, %v2119, %v2093
    %v2121 = vsel %vm1608, %v2120, %v2097
    %v2122 = vsel %vm1610, %v2121, %v2101
    %v2123 = vsel %vm1612, %v2122, %v2105
    %v2124 = vsel %vm1614, %v2123, %v2109
    %v2125 = vsel %vm1616, %v2124, %v2113
    %v2126 = vsel %vm1618, %v2125, %v2117
    %v2128 = vsel %vm1365, %v2126, 0
    %2130 = vmatprep.subr.mxu0 0.0
    %2131 = vmatpush1.msra.mxu0 %v1688
    %2132 = vmatprep.subr.mxu0 0.0
    %2133 = vmatpush1.msra.mxu0 %v1687
    %2134 = vmatprep.subr.mxu0 0.0
    %2135 = vmatpush1.msra.mxu0 %v1686
    %2136 = vmatprep.subr.mxu0 0.0
    %2137 = vmatpush1.msra.mxu0 %v1685
    %2138 = vmatprep.subr.mxu0 0.0
    %2139 = vmatpush1.msra.mxu0 %v1684
    %2140 = vmatprep.subr.mxu0 0.0
    %2141 = vmatpush1.msra.mxu0 %v1683
    %2142 = vmatprep.subr.mxu0 0.0
    %2143 = vmatpush1.msra.mxu0 %v1682
    %2144 = vmatprep.subr.mxu0 0.0
    %2145 = vmatpush1.msra.mxu0 %v1681
    %2146 = vmatprep.subr.mxu0 0.0
    %2147 = vmatpush1.msra.mxu0 %v1680
    %2148 = vmatprep.subr.mxu0 0.0
    %2149 = vmatpush1.msra.mxu0 %v1679
    %2150 = vmatprep.subr.mxu0 0.0
    %2151 = vmatpush1.msra.mxu0 %v1678
    %2152 = vmatprep.subr.mxu0 0.0
    %2153 = vmatpush1.msra.mxu0 %v1677
    %2154 = vmatprep.subr.mxu0 0.0
    %2155 = vmatpush1.msra.mxu0 %v1676
    %2156 = vmatprep.subr.mxu0 0.0
    %2157 = vmatpush1.msra.mxu0 %v1675
    %2158 = vmatprep.subr.mxu0 0.0
    %2159 = vmatpush1.msra.mxu0 %v1674
    %2160 = vmatprep.subr.mxu0 0.0
    %2161 = vmatpush1.msra.mxu0 %v1673
    %2162 = vmatprep.subr.mxu0 0.0
    %2163 = vmatpush2.msra.mxu0 0.0
    %2164 = vmatprep.subr.mxu0 0.0
    %2165 = vmatpush2.msra.mxu0 0.0
    %2166 = vmatprep.subr.mxu0 0.0
    %2167 = vmatpush2.msra.mxu0 0.0
    %2168 = vmatprep.subr.mxu0 0.0
    %2169 = vmatpush2.msra.mxu0 0.0
    %2170 = vmatprep.subr.mxu0 0.0
    %2171 = vmatpush2.msra.mxu0 0.0
    %2172 = vmatprep.subr.mxu0 0.0
    %2173 = vmatpush2.msra.mxu0 0.0
    %2174 = vmatprep.subr.mxu0 0.0
    %2175 = vmatpush2.msra.mxu0 0.0
    %2176 = vmatprep.subr.mxu0 0.0
    %2177 = vmatpush2.msra.mxu0 %v1697
    %2178 = vmatprep.subr.mxu0 0.0
    %2179 = vmatpush2.msra.mxu0 %v1696
    %2180 = vmatprep.subr.mxu0 0.0
    %2181 = vmatpush2.msra.mxu0 %v1695
    %2182 = vmatprep.subr.mxu0 0.0
    %2183 = vmatpush2.msra.mxu0 %v1694
    %2184 = vmatprep.subr.mxu0 0.0
    %2185 = vmatpush2.msra.mxu0 %v1693
    %2186 = vmatprep.subr.mxu0 0.0
    %2187 = vmatpush2.msra.mxu0 %v1692
    %2188 = vmatprep.subr.mxu0 0.0
    %2189 = vmatpush2.msra.mxu0 %v1691
    %2190 = vmatprep.subr.mxu0 0.0
    %2191 = vmatpush2.msra.mxu0 %v1690
    %2192 = vmatprep.subr.mxu0 0.0
    %2193 = vmatpush2.msra.mxu0 %v1689
    %2194 = vmatprep.mubr.f32.mxu0 %v2128
    %2195 = vmatmul.mubr.f32.gmra.mxu0 %v2086
    %v2196 = vpop.f32.mrf.mxu0
    %v2197 = vadd.f32 %v1702, %v2196
    %v2198 = vpop.f32.mrf.mxu0
    %2199 = vdwg.mxu0
    %v2201 = vrot.slane %v2197, 2
    %v2203 = vmax.f32 %v2197, %v2201
    %v2205 = vrot.slane %v2203, 4
    %v2207 = vmax.f32 %v2203, %v2205
    %vm2208 = vcmp.gt.f32.partialorder %v1786, 1.0
    %v2209 = vsel %vm2208, 1, 0
    %v2210 = vcvt.s32.f32 %v2209
    %v2211 = vmul.f32 %v1784, 0.9
    %v2212 = vadd.f32 %v2211, %v2207
    %v2213 = vmul.f32 %v1786, 0.8
    %v2214 = vadd.f32 %v2213, %v2212
    %v2215 = vsub.f32 %v2214, %v2210
    %v2216 = vld [vmem:[#allocation2 + $0x90] sm:$0xff]
    %v2217 = vld [vmem:[#allocation2 + $0x98] sm:$0xff]
    %v2218 = vld [vmem:[#allocation2 + $0xa0] sm:$0xff]
    %v2219 = vld [vmem:[#allocation2 + $0xa8] sm:$0xff]
    %v2220 = vld [vmem:[#allocation2 + $0xb0] sm:$0xff]
    %v2221 = vld [vmem:[#allocation2 + $0xb8] sm:$0xff]
    %v2222 = vld [vmem:[#allocation2 + $0xc0] sm:$0xff]
    %v2223 = vld [vmem:[#allocation2 + $0xc8] sm:$0xff]
    %v2224 = vld [vmem:[#allocation2 + $0xd0] sm:$0xff]
    %v2225 = vmul.f32 %v1805, 0.9
    %v2226 = vmul.f32 %v1806, 0.9
    %v2227 = vmul.f32 %v1807, 0.9
    %v2228 = vmul.f32 %v1808, 0.9
    %v2229 = vmul.f32 %v1809, 0.9
    %v2230 = vmul.f32 %v1810, 0.9
    %v2231 = vmul.f32 %v1811, 0.9
    %v2232 = vmul.f32 %v1812, 0.9
    %v2233 = vmul.f32 %v1813, 0.9
    %v2234 = vadd.f32 %v2225, %v2216
    %v2235 = vadd.f32 %v2226, %v2217
    %v2236 = vadd.f32 %v2227, %v2218
    %v2237 = vadd.f32 %v2228, %v2219
    %v2238 = vadd.f32 %v2229, %v2220
    %v2239 = vadd.f32 %v2230, %v2221
    %v2240 = vadd.f32 %v2231, %v2222
    %v2241 = vadd.f32 %v2232, %v2223
    %v2242 = vadd.f32 %v2233, %v2224
    %v2243 = vmul.f32 %v1832, 0.8
    %v2244 = vmul.f32 %v1833, 0.8
    %v2245 = vmul.f32 %v1834, 0.8
    %v2246 = vmul.f32 %v1835, 0.8
    %v2247 = vmul.f32 %v1836, 0.8
    %v2248 = vmul.f32 %v1837, 0.8
    %v2249 = vmul.f32 %v1838, 0.8
    %v2250 = vmul.f32 %v1839, 0.8
    %v2251 = vmul.f32 %v1840, 0.8
    %v2252 = vadd.f32 %v2243, %v2234
    %v2253 = vadd.f32 %v2244, %v2235
    %v2254 = vadd.f32 %v2245, %v2236
    %v2255 = vadd.f32 %v2246, %v2237
    %v2256 = vadd.f32 %v2247, %v2238
    %v2257 = vadd.f32 %v2248, %v2239
    %v2258 = vadd.f32 %v2249, %v2240
    %v2259 = vadd.f32 %v2250, %v2241
    %v2260 = vadd.f32 %v2251, %v2242
    %v2261 = vsub.f32 %v2252, %v1859
    %v2262 = vsub.f32 %v2253, %v1860
    %v2263 = vsub.f32 %v2254, %v1861
    %v2264 = vsub.f32 %v2255, %v1862
    %v2265 = vsub.f32 %v2256, %v1863
    %v2266 = vsub.f32 %v2257, %v1864
    %v2267 = vsub.f32 %v2258, %v1865
    %v2268 = vsub.f32 %v2259, %v1866
    %v2269 = vsub.f32 %v2260, %v1867
    %vm2270 = vcmp.gt.f32.partialorder %v2261, 1.0
    %vm2271 = vcmp.gt.f32.partialorder %v2262, 1.0
    %vm2272 = vcmp.gt.f32.partialorder %v2263, 1.0
    %vm2273 = vcmp.gt.f32.partialorder %v2264, 1.0
    %vm2274 = vcmp.gt.f32.partialorder %v2265, 1.0
    %vm2275 = vcmp.gt.f32.partialorder %v2266, 1.0
    %vm2276 = vcmp.gt.f32.partialorder %v2267, 1.0
    %vm2277 = vcmp.gt.f32.partialorder %v2268, 1.0
    %vm2278 = vcmp.gt.f32.partialorder %v2269, 1.0
    %v2279 = vsel %vm2270, 1, 0
    %v2280 = vsel %vm2271, 1, 0
    %v2281 = vsel %vm2272, 1, 0
    %v2282 = vsel %vm2273, 1, 0
    %v2283 = vsel %vm2274, 1, 0
    %v2284 = vsel %vm2275, 1, 0
    %v2285 = vsel %vm2276, 1, 0
    %v2286 = vsel %vm2277, 1, 0
    %v2287 = vsel %vm2278, 1, 0
    %v2288 = vcvt.s32.f32 %v2279
    %v2289 = vcvt.s32.f32 %v2280
    %v2290 = vcvt.s32.f32 %v2281
    %v2291 = vcvt.s32.f32 %v2282
    %v2292 = vcvt.s32.f32 %v2283
    %v2293 = vcvt.s32.f32 %v2284
    %v2294 = vcvt.s32.f32 %v2285
    %v2295 = vcvt.s32.f32 %v2286
    %v2296 = vcvt.s32.f32 %v2287
    %v2297 = vpack.c.bf16 %v2289, %v2288
    %v2298 = vpack.c.bf16 %v2291, %v2290
    %v2299 = vpack.c.bf16 %v2293, %v2292
    %v2300 = vpack.c.bf16 %v2295, %v2294
    %v2301 = vpack.c.bf16 %v2296, %v2296
    %v2303 = vsel %vm1405, %v2301, 0
    %2305 = vmatprep.subr.bf16.mxu0 0
    %2306 = vmatpush1.bf16.msra.mxu0 0
    %2307 = vmatprep.subr.bf16.mxu0 0
    %2308 = vmatpush1.bf16.msra.mxu0 0
    %2309 = vmatprep.subr.bf16.mxu0 0
    %2310 = vmatpush1.bf16.msra.mxu0 0
    %2311 = vmatprep.subr.bf16.mxu0 0
    %2312 = vmatpush1.bf16.msra.mxu0 %v2303
    %2313 = vmatprep.subr.bf16.mxu0 0
    %2314 = vmatpush1.bf16.msra.mxu0 %v2300
    %2315 = vmatprep.subr.bf16.mxu0 0
    %2316 = vmatpush1.bf16.msra.mxu0 %v2299
    %2317 = vmatprep.subr.bf16.mxu0 0
    %2318 = vmatpush1.bf16.msra.mxu0 %v2298
    %2319 = vmatprep.subr.bf16.mxu0 0
    %2320 = vmatpush1.bf16.msra.mxu0 %v2297
    %2321 = vmatprep.subr.bf16.mxu0 0
    %2322 = vmatpush2.bf16.msra.mxu0 0
    %2323 = vmatprep.subr.bf16.mxu0 0
    %2324 = vmatpush2.bf16.msra.mxu0 0
    %2325 = vmatprep.subr.bf16.mxu0 0
    %2326 = vmatpush2.bf16.msra.mxu0 0
    %2327 = vmatprep.subr.bf16.mxu0 0
    %2328 = vmatpush2.bf16.msra.mxu0 0
    %2329 = vmatprep.subr.bf16.mxu0 0
    %2330 = vmatpush2.bf16.msra.mxu0 0
    %2331 = vmatprep.subr.bf16.mxu0 0
    %2332 = vmatpush2.bf16.msra.mxu0 0
    %2333 = vmatprep.subr.bf16.mxu0 0
    %2334 = vmatpush2.bf16.msra.mxu0 0
    %2335 = vmatprep.subr.bf16.mxu0 0
    %2336 = vmatpush2.bf16.msra.mxu0 0
    %2337 = vmatprep.mubr.bf16.mxu0 0
    %2338 = vmatmul.mubr.bf16.gmra.mxu0 %v1367
    %v2339 = vpop.f32.mrf.mxu0
    %v2340 = vadd.f32 0.0, %v2339
    %v2341 = vpop.f32.mrf.mxu0
    %v2342 = vpop.f32.mrf.mxu0
    %v2343 = vadd.f32 0.0, %v2342
    %v2344 = vpop.f32.mrf.mxu0
    %2345 = vmatprep.mubr.bf16.mxu0 0
    %2346 = vmatmul.mubr.bf16.gmra.mxu0 %v1370
    %v2347 = vpop.f32.mrf.mxu0
    %v2348 = vadd.f32 0.0, %v2347
    %v2349 = vpop.f32.mrf.mxu0
    %v2350 = vpop.f32.mrf.mxu0
    %v2351 = vadd.f32 0.0, %v2350
    %v2352 = vpop.f32.mrf.mxu0
    %2353 = vmatprep.mubr.bf16.mxu0 0
    %2354 = vmatmul.mubr.bf16.gmra.mxu0 %v1373
    %v2355 = vpop.f32.mrf.mxu0
    %v2356 = vadd.f32 0.0, %v2355
    %v2357 = vpop.f32.mrf.mxu0
    %v2358 = vpop.f32.mrf.mxu0
    %v2359 = vadd.f32 0.0, %v2358
    %v2360 = vpop.f32.mrf.mxu0
    %2361 = vmatprep.mubr.bf16.mxu0 0
    %2362 = vmatmul.mubr.bf16.gmra.mxu0 %v1376
    %v2363 = vpop.f32.mrf.mxu0
    %v2364 = vadd.f32 0.0, %v2363
    %v2365 = vpop.f32.mrf.mxu0
    %v2366 = vpop.f32.mrf.mxu0
    %v2367 = vadd.f32 0.0, %v2366
    %v2368 = vpop.f32.mrf.mxu0
    %2369 = vmatprep.mubr.bf16.mxu0 0
    %2370 = vmatmul.mubr.bf16.gmra.mxu0 %v1379
    %v2371 = vpop.f32.mrf.mxu0
    %v2372 = vadd.f32 0.0, %v2371
    %v2373 = vpop.f32.mrf.mxu0
    %v2374 = vpop.f32.mrf.mxu0
    %v2375 = vadd.f32 0.0, %v2374
    %v2376 = vpop.f32.mrf.mxu0
    %2377 = vmatprep.mubr.bf16.mxu0 0
    %2378 = vmatmul.mubr.bf16.gmra.mxu0 %v1382
    %v2379 = vpop.f32.mrf.mxu0
    %v2380 = vadd.f32 0.0, %v2379
    %v2381 = vpop.f32.mrf.mxu0
    %v2382 = vpop.f32.mrf.mxu0
    %v2383 = vadd.f32 0.0, %v2382
    %v2384 = vpop.f32.mrf.mxu0
    %2385 = vmatprep.mubr.bf16.mxu0 0
    %2386 = vmatmul.mubr.bf16.gmra.mxu0 %v1385
    %v2387 = vpop.f32.mrf.mxu0
    %v2388 = vadd.f32 0.0, %v2387
    %v2389 = vpop.f32.mrf.mxu0
    %v2390 = vpop.f32.mrf.mxu0
    %v2391 = vadd.f32 0.0, %v2390
    %v2392 = vpop.f32.mrf.mxu0
    %2393 = vmatprep.mubr.bf16.mxu0 0
    %2394 = vmatmul.mubr.bf16.gmra.mxu0 %v1388
    %v2395 = vpop.f32.mrf.mxu0
    %v2396 = vadd.f32 0.0, %v2395
    %v2397 = vpop.f32.mrf.mxu0
    %v2398 = vpop.f32.mrf.mxu0
    %v2399 = vadd.f32 0.0, %v2398
    %v2400 = vpop.f32.mrf.mxu0
    %2401 = vmatprep.mubr.bf16.mxu0 0
    %2402 = vmatmul.mubr.bf16.gmra.mxu0 %v1391
    %v2403 = vpop.f32.mrf.mxu0
    %v2404 = vadd.f32 0.0, %v2403
    %v2405 = vpop.f32.mrf.mxu0
    %v2406 = vpop.f32.mrf.mxu0
    %v2407 = vadd.f32 0.0, %v2406
    %v2408 = vpop.f32.mrf.mxu0
    %2409 = vmatprep.mubr.bf16.mxu0 0
    %2410 = vmatmul.mubr.bf16.gmra.mxu0 %v1394
    %v2411 = vpop.f32.mrf.mxu0
    %v2412 = vadd.f32 0.0, %v2411
    %v2413 = vpop.f32.mrf.mxu0
    %v2414 = vpop.f32.mrf.mxu0
    %v2415 = vadd.f32 0.0, %v2414
    %v2416 = vpop.f32.mrf.mxu0
    %2417 = vmatprep.mubr.bf16.mxu0 0
    %2418 = vmatmul.mubr.bf16.gmra.mxu0 %v1397
    %v2419 = vpop.f32.mrf.mxu0
    %v2420 = vadd.f32 0.0, %v2419
    %v2421 = vpop.f32.mrf.mxu0
    %v2422 = vpop.f32.mrf.mxu0
    %v2423 = vadd.f32 0.0, %v2422
    %v2424 = vpop.f32.mrf.mxu0
    %2425 = vmatprep.mubr.bf16.mxu0 0
    %2426 = vmatmul.mubr.bf16.gmra.mxu0 %v1400
    %v2427 = vpop.f32.mrf.mxu0
    %v2428 = vadd.f32 0.0, %v2427
    %v2429 = vpop.f32.mrf.mxu0
    %v2430 = vpop.f32.mrf.mxu0
    %v2431 = vadd.f32 0.0, %v2430
    %v2432 = vpop.f32.mrf.mxu0
    %2433 = vmatprep.mubr.bf16.mxu0 0
    %2434 = vmatmul.mubr.bf16.gmra.mxu0 %v1403
    %v2435 = vpop.f32.mrf.mxu0
    %v2436 = vadd.f32 0.0, %v2435
    %v2437 = vpop.f32.mrf.mxu0
    %v2438 = vpop.f32.mrf.mxu0
    %v2439 = vpop.f32.mrf.mxu0
    %2440 = vdwg.mxu0
    %2442 = vrot.lane.b32.xlu0 %v2343, 8
    %v2443 = vpop.permute.xlu0 %2442
    %2446 = vrot.lane.b32.xlu0 %v2348, 16
    %v2447 = vpop.permute.xlu0 %2446
    %2450 = vrot.lane.b32.xlu0 %v2351, 24
    %v2451 = vpop.permute.xlu0 %2450
    %2454 = vrot.lane.b32.xlu0 %v2356, 32
    %v2455 = vpop.permute.xlu0 %2454
    %2458 = vrot.lane.b32.xlu0 %v2359, 40
    %v2459 = vpop.permute.xlu0 %2458
    %2462 = vrot.lane.b32.xlu0 %v2364, 48
    %v2463 = vpop.permute.xlu0 %2462
    %2466 = vrot.lane.b32.xlu0 %v2367, 56
    %v2467 = vpop.permute.xlu0 %2466
    %2470 = vrot.lane.b32.xlu0 %v2372, 64
    %v2471 = vpop.permute.xlu0 %2470
    %2474 = vrot.lane.b32.xlu0 %v2375, 72
    %v2475 = vpop.permute.xlu0 %2474
    %2478 = vrot.lane.b32.xlu0 %v2380, 80
    %v2479 = vpop.permute.xlu0 %2478
    %2482 = vrot.lane.b32.xlu0 %v2383, 88
    %v2483 = vpop.permute.xlu0 %2482
    %2486 = vrot.lane.b32.xlu0 %v2388, 96
    %v2487 = vpop.permute.xlu0 %2486
    %2490 = vrot.lane.b32.xlu0 %v2391, 104
    %v2491 = vpop.permute.xlu0 %2490
    %2494 = vrot.lane.b32.xlu0 %v2396, 112
    %v2495 = vpop.permute.xlu0 %2494
    %2498 = vrot.lane.b32.xlu0 %v2399, 120
    %v2499 = vpop.permute.xlu0 %2498
    %v2501 = vsel %vm1178, %v2340, %v2443
    %v2502 = vsel %vm1606, %v2501, %v2447
    %v2503 = vsel %vm1608, %v2502, %v2451
    %v2504 = vsel %vm1610, %v2503, %v2455
    %v2505 = vsel %vm1612, %v2504, %v2459
    %v2506 = vsel %vm1614, %v2505, %v2463
    %v2507 = vsel %vm1616, %v2506, %v2467
    %v2508 = vsel %vm1618, %v2507, %v2471
    %v2509 = vsel %vm1365, %v2508, %v2475
    %v2510 = vsel %vm1621, %v2509, %v2479
    %v2511 = vsel %vm1623, %v2510, %v2483
    %v2512 = vsel %vm1625, %v2511, %v2487
    %v2513 = vsel %vm1627, %v2512, %v2491
    %v2514 = vsel %vm1629, %v2513, %v2495
    %v2515 = vsel %vm1631, %v2514, %v2499
    %2517 = vrot.lane.b32.xlu0 %v2407, 8
    %v2518 = vpop.permute.xlu0 %2517
    %2521 = vrot.lane.b32.xlu0 %v2412, 16
    %v2522 = vpop.permute.xlu0 %2521
    %2525 = vrot.lane.b32.xlu0 %v2415, 24
    %v2526 = vpop.permute.xlu0 %2525
    %2529 = vrot.lane.b32.xlu0 %v2420, 32
    %v2530 = vpop.permute.xlu0 %2529
    %2533 = vrot.lane.b32.xlu0 %v2423, 40
    %v2534 = vpop.permute.xlu0 %2533
    %2537 = vrot.lane.b32.xlu0 %v2428, 48
    %v2538 = vpop.permute.xlu0 %2537
    %2541 = vrot.lane.b32.xlu0 %v2431, 56
    %v2542 = vpop.permute.xlu0 %2541
    %2545 = vrot.lane.b32.xlu0 %v2436, 64
    %v2546 = vpop.permute.xlu0 %2545
    %v2548 = vsel %vm1178, %v2404, %v2518
    %v2549 = vsel %vm1606, %v2548, %v2522
    %v2550 = vsel %vm1608, %v2549, %v2526
    %v2551 = vsel %vm1610, %v2550, %v2530
    %v2552 = vsel %vm1612, %v2551, %v2534
    %v2553 = vsel %vm1614, %v2552, %v2538
    %v2554 = vsel %vm1616, %v2553, %v2542
    %v2555 = vsel %vm1618, %v2554, %v2546
    %v2557 = vsel %vm1365, %v2555, 0
    %2559 = vmatprep.subr.mxu0 0.0
    %2560 = vmatpush1.msra.mxu0 %v1688
    %2561 = vmatprep.subr.mxu0 0.0
    %2562 = vmatpush1.msra.mxu0 %v1687
    %2563 = vmatprep.subr.mxu0 0.0
    %2564 = vmatpush1.msra.mxu0 %v1686
    %2565 = vmatprep.subr.mxu0 0.0
    %2566 = vmatpush1.msra.mxu0 %v1685
    %2567 = vmatprep.subr.mxu0 0.0
    %2568 = vmatpush1.msra.mxu0 %v1684
    %2569 = vmatprep.subr.mxu0 0.0
    %2570 = vmatpush1.msra.mxu0 %v1683
    %2571 = vmatprep.subr.mxu0 0.0
    %2572 = vmatpush1.msra.mxu0 %v1682
    %2573 = vmatprep.subr.mxu0 0.0
    %2574 = vmatpush1.msra.mxu0 %v1681
    %2575 = vmatprep.subr.mxu0 0.0
    %2576 = vmatpush1.msra.mxu0 %v1680
    %2577 = vmatprep.subr.mxu0 0.0
    %2578 = vmatpush1.msra.mxu0 %v1679
    %2579 = vmatprep.subr.mxu0 0.0
    %2580 = vmatpush1.msra.mxu0 %v1678
    %2581 = vmatprep.subr.mxu0 0.0
    %2582 = vmatpush1.msra.mxu0 %v1677
    %2583 = vmatprep.subr.mxu0 0.0
    %2584 = vmatpush1.msra.mxu0 %v1676
    %2585 = vmatprep.subr.mxu0 0.0
    %2586 = vmatpush1.msra.mxu0 %v1675
    %2587 = vmatprep.subr.mxu0 0.0
    %2588 = vmatpush1.msra.mxu0 %v1674
    %2589 = vmatprep.subr.mxu0 0.0
    %2590 = vmatpush1.msra.mxu0 %v1673
    %2591 = vmatprep.subr.mxu0 0.0
    %2592 = vmatpush2.msra.mxu0 0.0
    %2593 = vmatprep.subr.mxu0 0.0
    %2594 = vmatpush2.msra.mxu0 0.0
    %2595 = vmatprep.subr.mxu0 0.0
    %2596 = vmatpush2.msra.mxu0 0.0
    %2597 = vmatprep.subr.mxu0 0.0
    %2598 = vmatpush2.msra.mxu0 0.0
    %2599 = vmatprep.subr.mxu0 0.0
    %2600 = vmatpush2.msra.mxu0 0.0
    %2601 = vmatprep.subr.mxu0 0.0
    %2602 = vmatpush2.msra.mxu0 0.0
    %2603 = vmatprep.subr.mxu0 0.0
    %2604 = vmatpush2.msra.mxu0 0.0
    %2605 = vmatprep.subr.mxu0 0.0
    %2606 = vmatpush2.msra.mxu0 %v1697
    %2607 = vmatprep.subr.mxu0 0.0
    %2608 = vmatpush2.msra.mxu0 %v1696
    %2609 = vmatprep.subr.mxu0 0.0
    %2610 = vmatpush2.msra.mxu0 %v1695
    %2611 = vmatprep.subr.mxu0 0.0
    %2612 = vmatpush2.msra.mxu0 %v1694
    %2613 = vmatprep.subr.mxu0 0.0
    %2614 = vmatpush2.msra.mxu0 %v1693
    %2615 = vmatprep.subr.mxu0 0.0
    %2616 = vmatpush2.msra.mxu0 %v1692
    %2617 = vmatprep.subr.mxu0 0.0
    %2618 = vmatpush2.msra.mxu0 %v1691
    %2619 = vmatprep.subr.mxu0 0.0
    %2620 = vmatpush2.msra.mxu0 %v1690
    %2621 = vmatprep.subr.mxu0 0.0
    %2622 = vmatpush2.msra.mxu0 %v1689
    %2623 = vmatprep.mubr.f32.mxu0 %v2557
    %2624 = vmatmul.mubr.f32.gmra.mxu0 %v2515
    %v2625 = vpop.f32.mrf.mxu0
    %v2626 = vadd.f32 %v1702, %v2625
    %v2627 = vpop.f32.mrf.mxu0
    %2628 = vdwg.mxu0
    %v2630 = vrot.slane %v2626, 2
    %v2632 = vmax.f32 %v2626, %v2630
    %v2634 = vrot.slane %v2632, 4
    %v2636 = vmax.f32 %v2632, %v2634
    %vm2637 = vcmp.gt.f32.partialorder %v2215, 1.0
    %v2638 = vsel %vm2637, 1, 0
    %v2639 = vcvt.s32.f32 %v2638
    %v2640 = vmul.f32 %v2212, 0.9
    %v2641 = vadd.f32 %v2640, %v2636
    %v2642 = vmul.f32 %v2215, 0.8
    %v2643 = vadd.f32 %v2642, %v2641
    %v2644 = vsub.f32 %v2643, %v2639
    %vm2645 = vcmp.gt.f32.partialorder %v2644, 1.0
    %v2646 = vsel %vm2645, 1, 0
    %v2647 = vcvt.s32.f32 %v2646
    %v2648 = vld [vmem:[%s2 + $0x110] sm:$0xff]
    %v2649 = vld [vmem:[%s2 + $0x118] sm:$0xff]
    %v2650 = vld [vmem:[%s2 + $0x120] sm:$0x1]
    %v2651 = vlaneseq
    %v2652 = vshrl.u32 %v2651, 7
    %v2653 = vsub.s32 0, %v2652
    %v2654 = vrot.slane %v2650, %v2653
    %v2656 = vsel %vm1606, %v2647, 0
    %2658 = vmatprep.subr.mxu0 0.0
    %2659 = vmatpush1.msra.mxu0 0.0
    %2660 = vmatprep.subr.mxu0 0.0
    %2661 = vmatpush1.msra.mxu0 0.0
    %2662 = vmatprep.subr.mxu0 0.0
    %2663 = vmatpush1.msra.mxu0 0.0
    %2664 = vmatprep.subr.mxu0 0.0
    %2665 = vmatpush1.msra.mxu0 0.0
    %2666 = vmatprep.subr.mxu0 0.0
    %2667 = vmatpush1.msra.mxu0 0.0
    %2668 = vmatprep.subr.mxu0 0.0
    %2669 = vmatpush1.msra.mxu0 0.0
    %2670 = vmatprep.subr.mxu0 0.0
    %2671 = vmatpush1.msra.mxu0 0.0
    %2672 = vmatprep.subr.mxu0 0.0
    %2673 = vmatpush1.msra.mxu0 0.0
    %2674 = vmatprep.subr.mxu0 0.0
    %2675 = vmatpush1.msra.mxu0 0.0
    %2676 = vmatprep.subr.mxu0 0.0
    %2677 = vmatpush1.msra.mxu0 0.0
    %2678 = vmatprep.subr.mxu0 0.0
    %2679 = vmatpush1.msra.mxu0 0.0
    %2680 = vmatprep.subr.mxu0 0.0
    %2681 = vmatpush1.msra.mxu0 0.0
    %2682 = vmatprep.subr.mxu0 0.0
    %2683 = vmatpush1.msra.mxu0 0.0
    %2684 = vmatprep.subr.mxu0 0.0
    %2685 = vmatpush1.msra.mxu0 0.0
    %2686 = vmatprep.subr.mxu0 0.0
    %2687 = vmatpush1.msra.mxu0 %v2649
    %2688 = vmatprep.subr.mxu0 0.0
    %2689 = vmatpush1.msra.mxu0 %v2648
    %2690 = vmatprep.subr.mxu0 0.0
    %2691 = vmatpush2.msra.mxu0 0.0
    %2692 = vmatprep.subr.mxu0 0.0
    %2693 = vmatpush2.msra.mxu0 0.0
    %2694 = vmatprep.subr.mxu0 0.0
    %2695 = vmatpush2.msra.mxu0 0.0
    %2696 = vmatprep.subr.mxu0 0.0
    %2697 = vmatpush2.msra.mxu0 0.0
    %2698 = vmatprep.subr.mxu0 0.0
    %2699 = vmatpush2.msra.mxu0 0.0
    %2700 = vmatprep.subr.mxu0 0.0
    %2701 = vmatpush2.msra.mxu0 0.0
    %2702 = vmatprep.subr.mxu0 0.0
    %2703 = vmatpush2.msra.mxu0 0.0
    %2704 = vmatprep.subr.mxu0 0.0
    %2705 = vmatpush2.msra.mxu0 0.0
    %2706 = vmatprep.subr.mxu0 0.0
    %2707 = vmatpush2.msra.mxu0 0.0
    %2708 = vmatprep.subr.mxu0 0.0
    %2709 = vmatpush2.msra.mxu0 0.0
    %2710 = vmatprep.subr.mxu0 0.0
    %2711 = vmatpush2.msra.mxu0 0.0
    %2712 = vmatprep.subr.mxu0 0.0
    %2713 = vmatpush2.msra.mxu0 0.0
    %2714 = vmatprep.subr.mxu0 0.0
    %2715 = vmatpush2.msra.mxu0 0.0
    %2716 = vmatprep.subr.mxu0 0.0
    %2717 = vmatpush2.msra.mxu0 0.0
    %2718 = vmatprep.subr.mxu0 0.0
    %2719 = vmatpush2.msra.mxu0 0.0
    %2720 = vmatprep.subr.mxu0 0.0
    %2721 = vmatpush2.msra.mxu0 0.0
    %2722 = vmatprep.mubr.f32.mxu0 0.0
    %2723 = vmatmul.mubr.f32.gmra.mxu0 %v2656
    %v2724 = vpop.f32.mrf.mxu0
    %v2725 = vadd.f32 %v2654, %v2724
    %v2726 = vpop.f32.mrf.mxu0
    %2727 = vdwg.mxu0
    %2728 = vst [vmem:[#allocation3] sm:$0x3] %v2725
    // Predicated region
    $region14: #{scnn_forward.1} parent=1 // pred_check
      _
    $region15: #{scnn_forward.1} parent=1 // pred_check_branch
      %2730 = sbr.rel (0) target = $region17
    $region16: #{scnn_forward.1} parent=1 // pred_region
      %s2732 = ssub.s32 32, 32
      %2733 = vsyncadd [#allocation4], %s2732
      %s2735 = sshll.u32 [#allocation3], 4
      %s2736 = int_to_ptr.vmem [resolvable:$true] %s2735
      %2738 = dma.vmem_to_hbm [thread:$0]  %s2736, 32, %s3, [#allocation4]
    $region17: #{scnn_forward.1} parent=1 // pred_fallthru
      _
    // Predicated region
    $region18: #{scnn_forward.1} parent=1 // pred_check
      _
    $region19: #{scnn_forward.1} parent=1 // pred_check_branch
      %2740 = sbr.rel (0) target = $region21
    $region20: #{scnn_forward.1} parent=1 // pred_region
      %2741 = dma.done [#allocation4], 32
    $region21: #{scnn_forward.1} parent=1 // pred_fallthru
      _
    %2742 = vsyncpa [#allocation4], 1

</llo_original>
